<compile_context>
chip_gen: v5e
topology: v5e:2x2
jax: 0.10.0
libtpu: 0.0.40
codegen_flags: <defaults>
</compile_context>

<pallas_src>
import jax
import jax.numpy as jnp
from jax.experimental import pallas as pl
from jax.experimental.pallas import tpu as pltpu

KERNEL_SIZE = 3   # predictor_config['kernel_size'] (padding=1 'same' conv)
LN_EPS = 1e-5     # torch.nn.LayerNorm default


def _round_up(v, m):
    return (v + m - 1) // m * m


# --------------------------------------------------------------------------
# Fused forward: conv1 -> LN -> ReLU -> conv2 -> LN -> ReLU -> linear -> ReLU
# --------------------------------------------------------------------------
def variance_predictor_forward(x, params, *, compute_dtype=jnp.bfloat16):
    """x: [B, T, encoder_dim] -> [1, B, T] (eval-mode semantics)."""
    B, T, Cin = x.shape
    F = params["b1"].shape[0]
    K = KERNEL_SIZE

    # Lane/sublane-friendly padded sizes.
    Cin_p = _round_up(Cin, 128)
    F_p = _round_up(F, 128)
    T_p = _round_up(T, 8)
    Bt = min(B, 8)                       # batch rows per grid step
    B_p = _round_up(B, Bt)

    is_f32 = jnp.dtype(compute_dtype) == jnp.dtype(jnp.float32)
    prec = jax.lax.Precision.HIGHEST if is_f32 else jax.lax.Precision.DEFAULT

    # ---- wrapper-side packing: zero-pad channels to 128 lanes, stack taps ----
    xp = jnp.pad(x, ((0, B_p - B), (0, T_p - T), (0, Cin_p - Cin)))
    xp = xp.astype(compute_dtype)

    def conv_w(w, cin, cin_p):           # [K, cin, F] -> [K*cin_p, F_p]
        wp = jnp.pad(w, ((0, 0), (0, cin_p - cin), (0, F_p - F)))
        return wp.reshape(K * cin_p, F_p).astype(compute_dtype)

    def vec(p):                          # [F] -> [1, F_p] float32
        return jnp.pad(p.astype(jnp.float32), (0, F_p - F)).reshape(1, F_p)

    w1 = conv_w(params["w1"], Cin, Cin_p)
    w2 = conv_w(params["w2"], F, F_p)
    b1, g1, be1 = vec(params["b1"]), vec(params["ln1_g"]), vec(params["ln1_b"])
    b2, g2, be2 = vec(params["b2"]), vec(params["ln2_g"]), vec(params["ln2_b"])
    wl = vec(params["w_lin"].reshape(-1))
    bl = params["b_lin"].reshape(1, 1).astype(jnp.float32)

    # ---- fused kernel (closure over real F / T for masking constants) ----
    def fused_kernel(x_ref, w1_ref, b1_ref, g1_ref, be1_ref,
                     w2_ref, b2_ref, g2_ref, be2_ref,
                     wl_ref, bl_ref, out_ref):
        bt, tb, _ = x_ref.shape
        fp = b1_ref.shape[-1]
        n = bt * tb
        inv_f = 1.0 / float(F)

        # Lane mask over real features (only when F was padded to 128 lanes).
        lane_mask = None
        if fp != F:
            lane_mask = (jax.lax.broadcasted_iota(jnp.int32, (1, fp), 1)
                         < F).astype(jnp.float32)

        def shifted_stack(h3):
            # h3: [bt, tb, c] -> [bt*tb, 3c] = [ x[t-1] | x[t] | x[t+1] ]
            # per-batch zero rows give exact 'same' padding, no boundary masks.
            c = h3.shape[-1]
            zero = jnp.zeros((bt, 1, c), h3.dtype)
            h_prev = jnp.concatenate([zero, h3[:, :tb - 1, :]], axis=1)
            h_next = jnp.concatenate([h3[:, 1:, :], zero], axis=1)
            return jnp.concatenate([h_prev, h3, h_next],
                                   axis=-1).reshape(n, 3 * c)

        def ln_relu(acc, b_ref, g_ref, beta_ref):
            acc = acc + b_ref[...]                          # conv bias [1,fp]
            mean = jnp.sum(acc, axis=-1, keepdims=True) * inv_f
            centered = acc - mean                           # two-pass variance
            cm = centered if lane_mask is None else centered * lane_mask
            var = jnp.sum(cm * cm, axis=-1, keepdims=True) * inv_f
            y = centered * jax.lax.rsqrt(var + LN_EPS) * g_ref[...] + beta_ref[...]
            return jnp.maximum(y, 0.0)                      # padded lanes stay 0

        x3 = x_ref[...]                                     # [bt, tb, cin_p]
        acc1 = jnp.dot(shifted_stack(x3), w1_ref[...],
                       preferred_element_type=jnp.float32, precision=prec)
        h1 = ln_relu(acc1, b1_ref, g1_ref, be1_ref)         # [n, fp] f32
        h1_3 = h1.astype(x3.dtype).reshape(bt, tb, fp)
        if T_p != T:
            # Zero padded time rows so conv2's 'same' padding stays exact.
            t_row = jax.lax.broadcasted_iota(jnp.int32, (1, tb, 1), 1)
            h1_3 = h1_3 * (t_row < T).astype(h1_3.dtype)
        acc2 = jnp.dot(shifted_stack(h1_3), w2_ref[...],
                       preferred_element_type=jnp.float32, precision=prec)
        h2 = ln_relu(acc2, b2_ref, g2_ref, be2_ref)         # [n, fp] f32

        # Linear(F -> 1) + ReLU epilogue (padded lanes of wl/h2 are zero).
        h2_3 = h2.reshape(bt, tb, fp)
        s = jnp.sum(h2_3 * wl_ref[...], axis=-1) + bl_ref[...]     # [bt, tb]
        out_ref[...] = jnp.maximum(s, 0.0).astype(out_ref.dtype)

    # ---- VMEM footprint estimate; only raise the scoped limit if needed ----
    itemsize = jnp.dtype(compute_dtype).itemsize
    n_rows = Bt * T_p
    est_vmem = (
        2 * Bt * T_p * Cin_p * itemsize                  # x (double-buffered)
        + 2 * K * (Cin_p + F_p) * F_p * itemsize         # conv weights (x2 bufs)
        + n_rows * K * (Cin_p + F_p) * itemsize          # shifted stacks
        + 6 * n_rows * F_p * 4                           # f32 conv/LN temps
        + 2 * Bt * T_p * 4                               # output (double-buffered)
    )
    cp_kwargs = {"dimension_semantics": ("parallel",)}    # batch across TCs (v7x)
    if est_vmem > 24 * 1024 * 1024:
        # For very long T, a T-tile grid axis with a 2-row halo is preferable
        # (v7x has only 64 MiB physical VMEM); at FastSpeech2 sizes this path
        # simply widens the scoped limit on v5e/v6e.
        cp_kwargs["vmem_limit_bytes"] = int(min(1.5 * est_vmem, 100 * 1024 * 1024))

    const2 = lambda b: (0, 0)       # noqa: E731  (constant-index operands)

    out = pl.pallas_call(
        fused_kernel,
        out_shape=jax.ShapeDtypeStruct((B_p, T_p), jnp.float32),
        grid_spec=pltpu.PrefetchScalarGridSpec(
            num_scalar_prefetch=0,
            grid=(B_p // Bt,),
            in_specs=[
                pl.BlockSpec((Bt, T_p, Cin_p), lambda b: (b, 0, 0)),  # x
                pl.BlockSpec((K * Cin_p, F_p), const2),               # w1 stacked
                pl.BlockSpec((1, F_p), const2),                       # b1
                pl.BlockSpec((1, F_p), const2),                       # ln1 gamma
                pl.BlockSpec((1, F_p), const2),                       # ln1 beta
                pl.BlockSpec((K * F_p, F_p), const2),                 # w2 stacked
                pl.BlockSpec((1, F_p), const2),                       # b2
                pl.BlockSpec((1, F_p), const2),                       # ln2 gamma
                pl.BlockSpec((1, F_p), const2),                       # ln2 beta
                pl.BlockSpec((1, F_p), const2),                       # w_lin
                pl.BlockSpec((1, 1), const2),                         # b_lin
            ],
            out_specs=pl.BlockSpec((Bt, T_p), lambda b: (b, 0)),
        ),
        compiler_params=pltpu.CompilerParams(**cp_kwargs),
    )(xp, w1, b1, g1, be1, w2, b2, g2, be2, wl, bl)

    # squeeze() on [B,T,1] -> [B,T]; eval mode -> unsqueeze(0) -> [1,B,T]
    return out[:B, :T][None, ...]


# --------------------------------------------------------------------------
# Pure-JAX f32 reference (mirrors the PyTorch module, eval mode)
# --------------------------------------------------------------------------
def variance_predictor_reference(x, params):
    def conv_ln_relu(h, w, b, g, be):
        T = h.shape[1]
        hp = jnp.pad(h, ((0, 0), (1, 1), (0, 0)))
        acc = sum(jnp.einsum("btc,cf->btf", hp[:, k:k + T, :], w[k],
                             precision=jax.lax.Precision.HIGHEST)
                  for k in range(KERNEL_SIZE)) + b
        mean = acc.mean(-1, keepdims=True)
        var = ((acc - mean) ** 2).mean(-1, keepdims=True)
        y = (acc - mean) / jnp.sqrt(var + LN_EPS) * g + be
        return jnp.maximum(y, 0.0)

    h = conv_ln_relu(x, params["w1"], params["b1"],
                     params["ln1_g"], params["ln1_b"])
    h = conv_ln_relu(h, params["w2"], params["b2"],
                     params["ln2_g"], params["ln2_b"])
    out = jnp.maximum(h @ params["w_lin"].T + params["b_lin"], 0.0)[..., 0]
    return out[None, ...]


def init_params(key, encoder_dim, filter_size, kernel_size):
    ks = jax.random.split(key, 8)
    scale1 = 1.0 / jnp.sqrt(encoder_dim * kernel_size)
    scale2 = 1.0 / jnp.sqrt(filter_size * kernel_size)
    scale3 = 1.0 / jnp.sqrt(filter_size)
    # torch Conv1d weight layout [Cout, Cin, K] -> our [K, Cin, Cout]
    w1_t = jax.random.normal(ks[0], (filter_size, encoder_dim, kernel_size),
                             jnp.float32) * scale1
    w2_t = jax.random.normal(ks[1], (filter_size, filter_size, kernel_size),
                             jnp.float32) * scale2
    return {
        "w1": jnp.transpose(w1_t, (2, 1, 0)),
        "b1": jax.random.normal(ks[2], (filter_size,), jnp.float32) * scale1,
        "ln1_g": jnp.ones((filter_size,), jnp.float32),
        "ln1_b": jnp.zeros((filter_size,), jnp.float32),
        "w2": jnp.transpose(w2_t, (2, 1, 0)),
        "b2": jax.random.normal(ks[3], (filter_size,), jnp.float32) * scale2,
        "ln2_g": jnp.ones((filter_size,), jnp.float32),
        "ln2_b": jnp.zeros((filter_size,), jnp.float32),
        # torch Linear(filter_size, 1): weight [1, F], bias [1]
        "w_lin": jax.random.normal(ks[4], (1, filter_size),
                                   jnp.float32) * scale3,
        "b_lin": jax.random.normal(ks[5], (1,), jnp.float32) * scale3,
    }


if __name__ == "__main__":
    B, T = 2, 8
    ENCODER_DIM = 32      # model_config['encoder_decoder']['encoder_dim']
    FILTER_SIZE = 32      # predictor_config['filter_size']

    key = jax.random.PRNGKey(0)
    k_x, k_p = jax.random.split(key)
    x = jax.random.normal(k_x, (B, T, ENCODER_DIM), jnp.float32)
    params = init_params(k_p, ENCODER_DIM, FILTER_SIZE, KERNEL_SIZE)

    ref = variance_predictor_reference(x, params)   # pure-JAX f32 reference

    # Tight parity check: f32 compute dtype end-to-end.
    out_f32 = variance_predictor_forward(x, params, compute_dtype=jnp.float32)
    jax.block_until_ready(out_f32)
    assert out_f32.shape == (1, B, T), out_f32.shape
    err32 = float(jnp.max(jnp.abs(out_f32 - ref)))
    assert err32 < 1e-3, f"f32 max abs err vs reference: {err32}"

    # Default path: bf16 MXU inputs, f32 accumulation / LayerNorm statistics.
    out_bf16 = variance_predictor_forward(x, params)
    jax.block_until_ready(out_bf16)
    assert out_bf16.shape == (1, B, T), out_bf16.shape
    err16 = float(jnp.max(jnp.abs(out_bf16 - ref)))
    assert err16 < 1e-1, f"bf16 max abs err vs reference: {err16}"

    print("KERNEL_OK")
</pallas_src>

<mosaic_0001>
module attributes {stable_mosaic.version = 11 : i64} {
  func.func @fused_kernel(%arg0: i32, %arg1: memref<2x8x128xf32, #tpu.memory_space<vmem>>, %arg2: memref<384x128xf32, #tpu.memory_space<vmem>>, %arg3: memref<1x128xf32, #tpu.memory_space<vmem>>, %arg4: memref<1x128xf32, #tpu.memory_space<vmem>>, %arg5: memref<1x128xf32, #tpu.memory_space<vmem>>, %arg6: memref<384x128xf32, #tpu.memory_space<vmem>>, %arg7: memref<1x128xf32, #tpu.memory_space<vmem>>, %arg8: memref<1x128xf32, #tpu.memory_space<vmem>>, %arg9: memref<1x128xf32, #tpu.memory_space<vmem>>, %arg10: memref<1x128xf32, #tpu.memory_space<vmem>>, %arg11: memref<1x1xf32, #tpu.memory_space<vmem>>, %arg12: memref<2x8xf32, #tpu.memory_space<vmem>>) attributes {dimension_semantics = [#tpu.dimension_semantics<parallel>], iteration_bounds = array<i64: 1>, scalar_prefetch = 0 : i64, scratch_operands = 0 : i64, tpu.core_type = #tpu.core_type<tc>, window_params = [{transform_indices = @transform_0, window_bounds = array<i64: 2, 8, 128>}, {pipeline_mode = #tpu.pipeline_mode<synchronous>, transform_indices = @transform_1, window_bounds = array<i64: 384, 128>}, {pipeline_mode = #tpu.pipeline_mode<synchronous>, transform_indices = @transform_2, window_bounds = array<i64: 1, 128>}, {pipeline_mode = #tpu.pipeline_mode<synchronous>, transform_indices = @transform_3, window_bounds = array<i64: 1, 128>}, {pipeline_mode = #tpu.pipeline_mode<synchronous>, transform_indices = @transform_4, window_bounds = array<i64: 1, 128>}, {pipeline_mode = #tpu.pipeline_mode<synchronous>, transform_indices = @transform_5, window_bounds = array<i64: 384, 128>}, {pipeline_mode = #tpu.pipeline_mode<synchronous>, transform_indices = @transform_6, window_bounds = array<i64: 1, 128>}, {pipeline_mode = #tpu.pipeline_mode<synchronous>, transform_indices = @transform_7, window_bounds = array<i64: 1, 128>}, {pipeline_mode = #tpu.pipeline_mode<synchronous>, transform_indices = @transform_8, window_bounds = array<i64: 1, 128>}, {pipeline_mode = #tpu.pipeline_mode<synchronous>, transform_indices = @transform_9, window_bounds = array<i64: 1, 128>}, {pipeline_mode = #tpu.pipeline_mode<synchronous>, transform_indices = @transform_10, window_bounds = array<i64: 1, 1>}, {transform_indices = @transform_11, window_bounds = array<i64: 2, 8>}]} {
    %0 = tpu.iota {dimensions = array<i32: 1>} : vector<1x128xi32>
    %c32_i32 = arith.constant 32 : i32
    %1 = vector.broadcast %c32_i32 : i32 to vector<1x128xi32>
    %2 = arith.cmpi slt, %0, %1 : vector<1x128xi32>
    %3 = arith.extui %2 : vector<1x128xi1> to vector<1x128xi32>
    %4 = arith.sitofp %3 : vector<1x128xi32> to vector<1x128xf32>
    %c0 = arith.constant 0 : index
    %c0_0 = arith.constant 0 : index
    %c0_1 = arith.constant 0 : index
    %5 = vector.load %arg1[%c0, %c0_0, %c0_1] : memref<2x8x128xf32, #tpu.memory_space<vmem>>, vector<2x8x128xf32>
    %cst = arith.constant 0.000000e+00 : f32
    %6 = vector.broadcast %cst : f32 to vector<2x1x128xf32>
    %7 = vector.extract_strided_slice %5 {offsets = [0, 0, 0], sizes = [2, 7, 128], strides = [1, 1, 1]} : vector<2x8x128xf32> to vector<2x7x128xf32>
    %8 = tpu.concatenate %6, %7 in 1 : vector<2x1x128xf32>, vector<2x7x128xf32> -> vector<2x8x128xf32>
    %9 = vector.extract_strided_slice %5 {offsets = [0, 1, 0], sizes = [2, 7, 128], strides = [1, 1, 1]} : vector<2x8x128xf32> to vector<2x7x128xf32>
    %10 = tpu.concatenate %9, %6 in 1 : vector<2x7x128xf32>, vector<2x1x128xf32> -> vector<2x8x128xf32>
    %11 = tpu.concatenate %8, %5, %10 in 2 : vector<2x8x128xf32>, vector<2x8x128xf32>, vector<2x8x128xf32> -> vector<2x8x384xf32>
    %12 = vector.shape_cast %11 : vector<2x8x384xf32> to vector<16x384xf32>
    %c0_2 = arith.constant 0 : index
    %c0_3 = arith.constant 0 : index
    %13 = vector.load %arg2[%c0_2, %c0_3] : memref<384x128xf32, #tpu.memory_space<vmem>>, vector<384x128xf32>
    %cst_4 = arith.constant dense<0.000000e+00> : vector<16x128xf32>
    %14 = tpu.matmul %12, %13, %cst_4 {dimension_numbers = #tpu.dot_dimension_numbers<[1], [0], [0], [1], [0, 0, 1, 1], [], []>, precision = #tpu.contract_precision<fp32>} : vector<16x384xf32>, vector<384x128xf32>, vector<16x128xf32> -> vector<16x128xf32>
    %c0_5 = arith.constant 0 : index
    %c0_6 = arith.constant 0 : index
    %15 = vector.load %arg3[%c0_5, %c0_6] : memref<1x128xf32, #tpu.memory_space<vmem>>, vector<1x128xf32>
    %16 = vector.broadcast %15 : vector<1x128xf32> to vector<16x128xf32>
    %17 = arith.addf %14, %16 : vector<16x128xf32>
    %cst_7 = arith.constant dense<0.000000e+00> : vector<16xf32>
    %18 = vector.multi_reduction <add>, %17, %cst_7 [1] : vector<16x128xf32> to vector<16xf32>
    %19 = vector.shape_cast %18 : vector<16xf32> to vector<16x1xf32>
    %cst_8 = arith.constant 3.125000e-02 : f32
    %20 = vector.broadcast %cst_8 : f32 to vector<16x1xf32>
    %21 = arith.mulf %19, %20 : vector<16x1xf32>
    %22 = vector.broadcast %21 : vector<16x1xf32> to vector<16x128xf32>
    %23 = arith.subf %17, %22 : vector<16x128xf32>
    %24 = vector.broadcast %4 : vector<1x128xf32> to vector<16x128xf32>
    %25 = arith.mulf %23, %24 : vector<16x128xf32>
    %26 = arith.mulf %25, %25 : vector<16x128xf32>
    %cst_9 = arith.constant dense<0.000000e+00> : vector<16xf32>
    %27 = vector.multi_reduction <add>, %26, %cst_9 [1] : vector<16x128xf32> to vector<16xf32>
    %28 = vector.shape_cast %27 : vector<16xf32> to vector<16x1xf32>
    %cst_10 = arith.constant 3.125000e-02 : f32
    %29 = vector.broadcast %cst_10 : f32 to vector<16x1xf32>
    %30 = arith.mulf %28, %29 : vector<16x1xf32>
    %cst_11 = arith.constant 9.99999974E-6 : f32
    %31 = vector.broadcast %cst_11 : f32 to vector<16x1xf32>
    %32 = arith.addf %30, %31 : vector<16x1xf32>
    %33 = math.rsqrt %32 : vector<16x1xf32>
    %34 = vector.broadcast %33 : vector<16x1xf32> to vector<16x128xf32>
    %35 = arith.mulf %23, %34 : vector<16x128xf32>
    %c0_12 = arith.constant 0 : index
    %c0_13 = arith.constant 0 : index
    %36 = vector.load %arg4[%c0_12, %c0_13] : memref<1x128xf32, #tpu.memory_space<vmem>>, vector<1x128xf32>
    %37 = vector.broadcast %36 : vector<1x128xf32> to vector<16x128xf32>
    %38 = arith.mulf %35, %37 : vector<16x128xf32>
    %c0_14 = arith.constant 0 : index
    %c0_15 = arith.constant 0 : index
    %39 = vector.load %arg5[%c0_14, %c0_15] : memref<1x128xf32, #tpu.memory_space<vmem>>, vector<1x128xf32>
    %40 = vector.broadcast %39 : vector<1x128xf32> to vector<16x128xf32>
    %41 = arith.addf %38, %40 : vector<16x128xf32>
    %cst_16 = arith.constant 0.000000e+00 : f32
    %42 = vector.broadcast %cst_16 : f32 to vector<16x128xf32>
    %43 = arith.maximumf %41, %42 : vector<16x128xf32>
    %44 = vector.shape_cast %43 : vector<16x128xf32> to vector<2x8x128xf32>
    %cst_17 = arith.constant 0.000000e+00 : f32
    %45 = vector.broadcast %cst_17 : f32 to vector<2x1x128xf32>
    %46 = vector.extract_strided_slice %44 {offsets = [0, 0, 0], sizes = [2, 7, 128], strides = [1, 1, 1]} : vector<2x8x128xf32> to vector<2x7x128xf32>
    %47 = tpu.concatenate %45, %46 in 1 : vector<2x1x128xf32>, vector<2x7x128xf32> -> vector<2x8x128xf32>
    %48 = vector.extract_strided_slice %44 {offsets = [0, 1, 0], sizes = [2, 7, 128], strides = [1, 1, 1]} : vector<2x8x128xf32> to vector<2x7x128xf32>
    %49 = tpu.concatenate %48, %45 in 1 : vector<2x7x128xf32>, vector<2x1x128xf32> -> vector<2x8x128xf32>
    %50 = tpu.concatenate %47, %44, %49 in 2 : vector<2x8x128xf32>, vector<2x8x128xf32>, vector<2x8x128xf32> -> vector<2x8x384xf32>
    %51 = vector.shape_cast %50 : vector<2x8x384xf32> to vector<16x384xf32>
    %c0_18 = arith.constant 0 : index
    %c0_19 = arith.constant 0 : index
    %52 = vector.load %arg6[%c0_18, %c0_19] : memref<384x128xf32, #tpu.memory_space<vmem>>, vector<384x128xf32>
    %cst_20 = arith.constant dense<0.000000e+00> : vector<16x128xf32>
    %53 = tpu.matmul %51, %52, %cst_20 {dimension_numbers = #tpu.dot_dimension_numbers<[1], [0], [0], [1], [0, 0, 1, 1], [], []>, precision = #tpu.contract_precision<fp32>} : vector<16x384xf32>, vector<384x128xf32>, vector<16x128xf32> -> vector<16x128xf32>
    %c0_21 = arith.constant 0 : index
    %c0_22 = arith.constant 0 : index
    %54 = vector.load %arg7[%c0_21, %c0_22] : memref<1x128xf32, #tpu.memory_space<vmem>>, vector<1x128xf32>
    %55 = vector.broadcast %54 : vector<1x128xf32> to vector<16x128xf32>
    %56 = arith.addf %53, %55 : vector<16x128xf32>
    %cst_23 = arith.constant dense<0.000000e+00> : vector<16xf32>
    %57 = vector.multi_reduction <add>, %56, %cst_23 [1] : vector<16x128xf32> to vector<16xf32>
    %58 = vector.shape_cast %57 : vector<16xf32> to vector<16x1xf32>
    %cst_24 = arith.constant 3.125000e-02 : f32
    %59 = vector.broadcast %cst_24 : f32 to vector<16x1xf32>
    %60 = arith.mulf %58, %59 : vector<16x1xf32>
    %61 = vector.broadcast %60 : vector<16x1xf32> to vector<16x128xf32>
    %62 = arith.subf %56, %61 : vector<16x128xf32>
    %63 = vector.broadcast %4 : vector<1x128xf32> to vector<16x128xf32>
    %64 = arith.mulf %62, %63 : vector<16x128xf32>
    %65 = arith.mulf %64, %64 : vector<16x128xf32>
    %cst_25 = arith.constant dense<0.000000e+00> : vector<16xf32>
    %66 = vector.multi_reduction <add>, %65, %cst_25 [1] : vector<16x128xf32> to vector<16xf32>
    %67 = vector.shape_cast %66 : vector<16xf32> to vector<16x1xf32>
    %cst_26 = arith.constant 3.125000e-02 : f32
    %68 = vector.broadcast %cst_26 : f32 to vector<16x1xf32>
    %69 = arith.mulf %67, %68 : vector<16x1xf32>
    %cst_27 = arith.constant 9.99999974E-6 : f32
    %70 = vector.broadcast %cst_27 : f32 to vector<16x1xf32>
    %71 = arith.addf %69, %70 : vector<16x1xf32>
    %72 = math.rsqrt %71 : vector<16x1xf32>
    %73 = vector.broadcast %72 : vector<16x1xf32> to vector<16x128xf32>
    %74 = arith.mulf %62, %73 : vector<16x128xf32>
    %c0_28 = arith.constant 0 : index
    %c0_29 = arith.constant 0 : index
    %75 = vector.load %arg8[%c0_28, %c0_29] : memref<1x128xf32, #tpu.memory_space<vmem>>, vector<1x128xf32>
    %76 = vector.broadcast %75 : vector<1x128xf32> to vector<16x128xf32>
    %77 = arith.mulf %74, %76 : vector<16x128xf32>
    %c0_30 = arith.constant 0 : index
    %c0_31 = arith.constant 0 : index
    %78 = vector.load %arg9[%c0_30, %c0_31] : memref<1x128xf32, #tpu.memory_space<vmem>>, vector<1x128xf32>
    %79 = vector.broadcast %78 : vector<1x128xf32> to vector<16x128xf32>
    %80 = arith.addf %77, %79 : vector<16x128xf32>
    %cst_32 = arith.constant 0.000000e+00 : f32
    %81 = vector.broadcast %cst_32 : f32 to vector<16x128xf32>
    %82 = arith.maximumf %80, %81 : vector<16x128xf32>
    %83 = vector.shape_cast %82 : vector<16x128xf32> to vector<2x8x128xf32>
    %c0_33 = arith.constant 0 : index
    %c0_34 = arith.constant 0 : index
    %84 = vector.load %arg10[%c0_33, %c0_34] : memref<1x128xf32, #tpu.memory_space<vmem>>, vector<1x128xf32>
    %85 = vector.shape_cast %84 : vector<1x128xf32> to vector<1x1x128xf32>
    %86 = vector.broadcast %85 : vector<1x1x128xf32> to vector<2x8x128xf32>
    %87 = arith.mulf %83, %86 : vector<2x8x128xf32>
    %cst_35 = arith.constant dense<0.000000e+00> : vector<2x8xf32>
    %88 = vector.multi_reduction <add>, %87, %cst_35 [2] : vector<2x8x128xf32> to vector<2x8xf32>
    %c0_36 = arith.constant 0 : index
    %c0_37 = arith.constant 0 : index
    %89 = vector.load %arg11[%c0_36, %c0_37] : memref<1x1xf32, #tpu.memory_space<vmem>>, vector<1x1xf32>
    %90 = vector.broadcast %89 : vector<1x1xf32> to vector<2x8xf32>
    %91 = arith.addf %88, %90 : vector<2x8xf32>
    %cst_38 = arith.constant 0.000000e+00 : f32
    %92 = vector.broadcast %cst_38 : f32 to vector<2x8xf32>
    %93 = arith.maximumf %91, %92 : vector<2x8xf32>
    %c0_39 = arith.constant 0 : index
    %c0_40 = arith.constant 0 : index
    %94 = vector.load %arg12[%c0_39, %c0_40] : memref<2x8xf32, #tpu.memory_space<vmem>>, vector<2x8xf32>
    tpu.vector_store %arg12[%c0_39, %c0_40], %93 {strides = array<i32>} : memref<2x8xf32, #tpu.memory_space<vmem>>, vector<2x8xf32>,
    return
  }
  func.func @transform_0(%arg0: i32) -> (i32, i32, i32) {
    %c0_i32 = arith.constant 0 : i32
    %c0_i32_0 = arith.constant 0 : i32
    %c0_i32_1 = arith.constant 0 : i32
    return %arg0, %c0_i32, %c0_i32_0 : i32, i32, i32
  }
  func.func @transform_1(%arg0: i32) -> (i32, i32) {
    %c0_i32 = arith.constant 0 : i32
    %c0_i32_0 = arith.constant 0 : i32
    %c0_i32_1 = arith.constant 0 : i32
    return %c0_i32, %c0_i32_0 : i32, i32
  }
  func.func @transform_2(%arg0: i32) -> (i32, i32) {
    %c0_i32 = arith.constant 0 : i32
    %c0_i32_0 = arith.constant 0 : i32
    %c0_i32_1 = arith.constant 0 : i32
    return %c0_i32, %c0_i32_0 : i32, i32
  }
  func.func @transform_3(%arg0: i32) -> (i32, i32) {
    %c0_i32 = arith.constant 0 : i32
    %c0_i32_0 = arith.constant 0 : i32
    %c0_i32_1 = arith.constant 0 : i32
    return %c0_i32, %c0_i32_0 : i32, i32
  }
  func.func @transform_4(%arg0: i32) -> (i32, i32) {
    %c0_i32 = arith.constant 0 : i32
    %c0_i32_0 = arith.constant 0 : i32
    %c0_i32_1 = arith.constant 0 : i32
    return %c0_i32, %c0_i32_0 : i32, i32
  }
  func.func @transform_5(%arg0: i32) -> (i32, i32) {
    %c0_i32 = arith.constant 0 : i32
    %c0_i32_0 = arith.constant 0 : i32
    %c0_i32_1 = arith.constant 0 : i32
    return %c0_i32, %c0_i32_0 : i32, i32
  }
  func.func @transform_6(%arg0: i32) -> (i32, i32) {
    %c0_i32 = arith.constant 0 : i32
    %c0_i32_0 = arith.constant 0 : i32
    %c0_i32_1 = arith.constant 0 : i32
    return %c0_i32, %c0_i32_0 : i32, i32
  }
  func.func @transform_7(%arg0: i32) -> (i32, i32) {
    %c0_i32 = arith.constant 0 : i32
    %c0_i32_0 = arith.constant 0 : i32
    %c0_i32_1 = arith.constant 0 : i32
    return %c0_i32, %c0_i32_0 : i32, i32
  }
  func.func @transform_8(%arg0: i32) -> (i32, i32) {
    %c0_i32 = arith.constant 0 : i32
    %c0_i32_0 = arith.constant 0 : i32
    %c0_i32_1 = arith.constant 0 : i32
    return %c0_i32, %c0_i32_0 : i32, i32
  }
  func.func @transform_9(%arg0: i32) -> (i32, i32) {
    %c0_i32 = arith.constant 0 : i32
    %c0_i32_0 = arith.constant 0 : i32
    %c0_i32_1 = arith.constant 0 : i32
    return %c0_i32, %c0_i32_0 : i32, i32
  }
  func.func @transform_10(%arg0: i32) -> (i32, i32) {
    %c0_i32 = arith.constant 0 : i32
    %c0_i32_0 = arith.constant 0 : i32
    %c0_i32_1 = arith.constant 0 : i32
    return %c0_i32, %c0_i32_0 : i32, i32
  }
  func.func @transform_11(%arg0: i32) -> (i32, i32) {
    %c0_i32 = arith.constant 0 : i32
    %c0_i32_0 = arith.constant 0 : i32
    return %arg0, %c0_i32 : i32, i32
  }
}

</mosaic_0001>

<llo_original>
// kernel: tpu_custom_call.1
$region0: #{tpu_custom_call.1}
  #allocation0 [shape = 'u32[]', space=smem, size = 0x4, offset = 0x4, fixed_abs, tag = 'smem constant byte address 0x4 - core index']
  #allocation1 [shape = 'u32[72,128]{1,0:T(1,128)}', space=vmem, size = 0x9000, scoped, tag = 'internal scratch']
  #allocation2 [shape = 'f32[1,1]{1,0:T(1,128)S(1)}', space=vmem, size = 0x200, scoped, tag = 'scoped memory for tpu_custom_call.1']
  %s0 = inlined_call_operand.hbm [shape: f32[2,8,128], index: 0, kind: input, shape index: {}]
  %s1 = inlined_call_operand.hbm [shape: f32[384,128], index: 1, kind: input, shape index: {}]
  %s2 = inlined_call_operand.vmem [shape: f32[1,128], index: 2, kind: input, shape index: {}]
  %s3 = inlined_call_operand.vmem [shape: f32[1,128], index: 3, kind: input, shape index: {}]
  %s4 = inlined_call_operand.vmem [shape: f32[1,128], index: 4, kind: input, shape index: {}]
  %s5 = inlined_call_operand.hbm [shape: f32[384,128], index: 5, kind: input, shape index: {}]
  %s6 = inlined_call_operand.vmem [shape: f32[1,128], index: 6, kind: input, shape index: {}]
  %s7 = inlined_call_operand.vmem [shape: f32[1,128], index: 7, kind: input, shape index: {}]
  %s8 = inlined_call_operand.vmem [shape: f32[1,128], index: 8, kind: input, shape index: {}]
  %s9 = inlined_call_operand.vmem [shape: f32[1,128], index: 9, kind: input, shape index: {}]
  %s10 = inlined_call_operand.<no memory space> [shape: f32[1,1], index: 10, kind: input, shape index: {}]
  %s11 = inlined_call_operand.hbm [shape: f32[2,8], index: 11, kind: output, shape index: {}]
  %s12 = sld [smem:[#allocation0]]
  $region66: #{tpu_custom_call.1} parent=0
    _
  %s14 = ssub.s32 1, %s12
  %s15 = scalar_select 0, %s14, %s12
  %v16 = vstv %s10
  %17 = vst [vmem:[#allocation2] sm:$0x1] %v16
  $region1: #{tpu_custom_call.1} parent=0
    #allocation3 [shape = 'u8[8192]{0}', space=vmem, size = 0x2000, scoped, tag = 'input window, operand 0, single buffered']
    #allocation4 [shape = 's32[1]{0}', space=sflag, size = 0x4, scoped, tag = 'scoped memory for tpu_custom_call.1']
    #allocation5 [shape = 's32[1]{0}', space=sflag, size = 0x4, scoped, tag = 'scoped memory for tpu_custom_call.1']
    #allocation6 [shape = 'u8[196608]{0}', space=vmem, size = 0x30000, scoped, tag = 'input window, operand 1, single buffered']
    #allocation7 [shape = 's32[1]{0}', space=sflag, size = 0x4, scoped, tag = 'scoped memory for tpu_custom_call.1']
    #allocation8 [shape = 'u8[196608]{0}', space=vmem, size = 0x30000, scoped, tag = 'input window, operand 5, single buffered']
    #allocation9 [shape = 'u8[1024]{0}', space=vmem, size = 0x400, scoped, tag = 'output window, operand 0, single buffered']
    %18 = vsyncpa [#allocation4], 0
    %19 = vsyncpa [#allocation7], 0
    %20 = vsyncpa [#allocation5], 0
    // Predicated region
    $region2: #{tpu_custom_call.1} parent=1 // pred_check
      _
    $region3: #{tpu_custom_call.1} parent=1 // pred_check_branch
      %22 = sbr.rel (0) target = $region5
    $region4: #{tpu_custom_call.1} parent=1 // pred_region
      %24 = vsyncadd [#allocation4], 0
      %s25 = sshll.u32 %s0, 4
      %s26 = int_to_ptr.hbm [resolvable:$true] %s25
      %s27 = sshll.u32 [#allocation3], 4
      %s28 = int_to_ptr.vmem [resolvable:$true] %s27
      %33 = dma.hbm_to_vmem [thread:$0]  %s26, 256, %s28, [#allocation4], 128, 128, 8
    $region5: #{tpu_custom_call.1} parent=1 // pred_fallthru
      _
    // Predicated region
    $region6: #{tpu_custom_call.1} parent=1 // pred_check
      _
    $region7: #{tpu_custom_call.1} parent=1 // pred_check_branch
      %35 = sbr.rel (0) target = $region9
    $region8: #{tpu_custom_call.1} parent=1 // pred_region
      %37 = vsyncadd [#allocation7], 0
      %s38 = sshll.u32 %s1, 4
      %s39 = int_to_ptr.hbm [resolvable:$true] %s38
      %s40 = sshll.u32 [#allocation6], 4
      %s41 = int_to_ptr.vmem [resolvable:$true] %s40
      %46 = dma.hbm_to_vmem [thread:$0]  %s39, 6144, %s41, [#allocation7], 128, 128, 8
    $region9: #{tpu_custom_call.1} parent=1 // pred_fallthru
      _
    // Predicated region
    $region10: #{tpu_custom_call.1} parent=1 // pred_check
      _
    $region11: #{tpu_custom_call.1} parent=1 // pred_check_branch
      %48 = sbr.rel (0) target = $region13
    $region12: #{tpu_custom_call.1} parent=1 // pred_region
      _
    $region13: #{tpu_custom_call.1} parent=1 // pred_fallthru
      _
    // Predicated region
    $region14: #{tpu_custom_call.1} parent=1 // pred_check
      _
    $region15: #{tpu_custom_call.1} parent=1 // pred_check_branch
      %50 = sbr.rel (0) target = $region17
    $region16: #{tpu_custom_call.1} parent=1 // pred_region
      _
    $region17: #{tpu_custom_call.1} parent=1 // pred_fallthru
      _
    // Predicated region
    $region18: #{tpu_custom_call.1} parent=1 // pred_check
      _
    $region19: #{tpu_custom_call.1} parent=1 // pred_check_branch
      %52 = sbr.rel (0) target = $region21
    $region20: #{tpu_custom_call.1} parent=1 // pred_region
      _
    $region21: #{tpu_custom_call.1} parent=1 // pred_fallthru
      _
    // Predicated region
    $region22: #{tpu_custom_call.1} parent=1 // pred_check
      _
    $region23: #{tpu_custom_call.1} parent=1 // pred_check_branch
      %54 = sbr.rel (0) target = $region25
    $region24: #{tpu_custom_call.1} parent=1 // pred_region
      %56 = vsyncadd [#allocation7], 0
      %s57 = sshll.u32 %s5, 4
      %s58 = int_to_ptr.hbm [resolvable:$true] %s57
      %s59 = sshll.u32 [#allocation8], 4
      %s60 = int_to_ptr.vmem [resolvable:$true] %s59
      %65 = dma.hbm_to_vmem [thread:$0]  %s58, 6144, %s60, [#allocation7], 128, 128, 8
    $region25: #{tpu_custom_call.1} parent=1 // pred_fallthru
      _
    // Predicated region
    $region26: #{tpu_custom_call.1} parent=1 // pred_check
      _
    $region27: #{tpu_custom_call.1} parent=1 // pred_check_branch
      %67 = sbr.rel (0) target = $region29
    $region28: #{tpu_custom_call.1} parent=1 // pred_region
      _
    $region29: #{tpu_custom_call.1} parent=1 // pred_fallthru
      _
    // Predicated region
    $region30: #{tpu_custom_call.1} parent=1 // pred_check
      _
    $region31: #{tpu_custom_call.1} parent=1 // pred_check_branch
      %69 = sbr.rel (0) target = $region33
    $region32: #{tpu_custom_call.1} parent=1 // pred_region
      _
    $region33: #{tpu_custom_call.1} parent=1 // pred_fallthru
      _
    // Predicated region
    $region34: #{tpu_custom_call.1} parent=1 // pred_check
      _
    $region35: #{tpu_custom_call.1} parent=1 // pred_check_branch
      %71 = sbr.rel (0) target = $region37
    $region36: #{tpu_custom_call.1} parent=1 // pred_region
      _
    $region37: #{tpu_custom_call.1} parent=1 // pred_fallthru
      _
    // Predicated region
    $region38: #{tpu_custom_call.1} parent=1 // pred_check
      _
    $region39: #{tpu_custom_call.1} parent=1 // pred_check_branch
      %73 = sbr.rel (0) target = $region41
    $region40: #{tpu_custom_call.1} parent=1 // pred_region
      _
    $region41: #{tpu_custom_call.1} parent=1 // pred_fallthru
      _
    // Predicated region
    $region42: #{tpu_custom_call.1} parent=1 // pred_check
      _
    $region43: #{tpu_custom_call.1} parent=1 // pred_check_branch
      %75 = sbr.rel (0) target = $region45
    $region44: #{tpu_custom_call.1} parent=1 // pred_region
      _
    $region45: #{tpu_custom_call.1} parent=1 // pred_fallthru
      _
    // Predicated region
    $region46: #{tpu_custom_call.1} parent=1 // pred_check
      _
    $region47: #{tpu_custom_call.1} parent=1 // pred_check_branch
      %77 = sbr.rel (0) target = $region49
    $region48: #{tpu_custom_call.1} parent=1 // pred_region
      %79 = dma.done [#allocation4], 256
    $region49: #{tpu_custom_call.1} parent=1 // pred_fallthru
      _
    // Predicated region
    $region50: #{tpu_custom_call.1} parent=1 // pred_check
      _
    $region51: #{tpu_custom_call.1} parent=1 // pred_check_branch
      %81 = sbr.rel (0) target = $region53
    $region52: #{tpu_custom_call.1} parent=1 // pred_region
      %83 = dma.done [#allocation7], 6144
    $region53: #{tpu_custom_call.1} parent=1 // pred_fallthru
      _
    // Predicated region
    $region54: #{tpu_custom_call.1} parent=1 // pred_check
      _
    $region55: #{tpu_custom_call.1} parent=1 // pred_check_branch
      %85 = sbr.rel (0) target = $region57
    $region56: #{tpu_custom_call.1} parent=1 // pred_region
      %87 = dma.done [#allocation7], 6144
    $region57: #{tpu_custom_call.1} parent=1 // pred_fallthru
      _
    %v88 = vlaneseq
    %v89 = vand.u32 %v88, 127
    %vm90 = vcmp.lt.s32.totalorder %v89, 32
    %v91 = vsel %vm90, 1, 0
    %v92 = vcvt.s32.f32 %v91
    %v93 = vld [vmem:[#allocation3] sm:$0xff]
    %v94 = vld [vmem:[#allocation3 + $0x8] sm:$0xff]
    %v97 = vrot.slane %v93, 7
    %v98 = vrot.slane %v94, 7
    %vm101 = vcmask 1040384
    %v102 = vsel %vm101, 0.0, %v97
    %v103 = vsel %vm101, 0.0, %v98
    %v104 = vrot.slane %v93, 1
    %v105 = vrot.slane %v94, 1
    %vm108 = vcmask 1046528
    %v109 = vsel %vm108, %v104, 0.0
    %v110 = vsel %vm108, %v105, 0.0
    %v111 = vld [vmem:[#allocation6] sm:$0xff]
    %v112 = vld [vmem:[#allocation6 + $0x8] sm:$0xff]
    %v113 = vld [vmem:[#allocation6 + $0x10] sm:$0xff]
    %v114 = vld [vmem:[#allocation6 + $0x18] sm:$0xff]
    %v115 = vld [vmem:[#allocation6 + $0x20] sm:$0xff]
    %v116 = vld [vmem:[#allocation6 + $0x28] sm:$0xff]
    %v117 = vld [vmem:[#allocation6 + $0x30] sm:$0xff]
    %v118 = vld [vmem:[#allocation6 + $0x38] sm:$0xff]
    %v119 = vld [vmem:[#allocation6 + $0x40] sm:$0xff]
    %v120 = vld [vmem:[#allocation6 + $0x48] sm:$0xff]
    %v121 = vld [vmem:[#allocation6 + $0x50] sm:$0xff]
    %v122 = vld [vmem:[#allocation6 + $0x58] sm:$0xff]
    %v123 = vld [vmem:[#allocation6 + $0x60] sm:$0xff]
    %v124 = vld [vmem:[#allocation6 + $0x68] sm:$0xff]
    %v125 = vld [vmem:[#allocation6 + $0x70] sm:$0xff]
    %v126 = vld [vmem:[#allocation6 + $0x78] sm:$0xff]
    %v127 = vld [vmem:[#allocation6 + $0x80] sm:$0xff]
    %v128 = vld [vmem:[#allocation6 + $0x88] sm:$0xff]
    %v129 = vld [vmem:[#allocation6 + $0x90] sm:$0xff]
    %v130 = vld [vmem:[#allocation6 + $0x98] sm:$0xff]
    %v131 = vld [vmem:[#allocation6 + $0xa0] sm:$0xff]
    %v132 = vld [vmem:[#allocation6 + $0xa8] sm:$0xff]
    %v133 = vld [vmem:[#allocation6 + $0xb0] sm:$0xff]
    %v134 = vld [vmem:[#allocation6 + $0xb8] sm:$0xff]
    %v135 = vld [vmem:[#allocation6 + $0xc0] sm:$0xff]
    %v136 = vld [vmem:[#allocation6 + $0xc8] sm:$0xff]
    %v137 = vld [vmem:[#allocation6 + $0xd0] sm:$0xff]
    %v138 = vld [vmem:[#allocation6 + $0xd8] sm:$0xff]
    %v139 = vld [vmem:[#allocation6 + $0xe0] sm:$0xff]
    %v140 = vld [vmem:[#allocation6 + $0xe8] sm:$0xff]
    %v141 = vld [vmem:[#allocation6 + $0xf0] sm:$0xff]
    %v142 = vld [vmem:[#allocation6 + $0xf8] sm:$0xff]
    %v143 = vld [vmem:[#allocation6 + $0x100] sm:$0xff]
    %v144 = vld [vmem:[#allocation6 + $0x108] sm:$0xff]
    %v145 = vld [vmem:[#allocation6 + $0x110] sm:$0xff]
    %v146 = vld [vmem:[#allocation6 + $0x118] sm:$0xff]
    %v147 = vld [vmem:[#allocation6 + $0x120] sm:$0xff]
    %v148 = vld [vmem:[#allocation6 + $0x128] sm:$0xff]
    %v149 = vld [vmem:[#allocation6 + $0x130] sm:$0xff]
    %v150 = vld [vmem:[#allocation6 + $0x138] sm:$0xff]
    %v151 = vld [vmem:[#allocation6 + $0x140] sm:$0xff]
    %v152 = vld [vmem:[#allocation6 + $0x148] sm:$0xff]
    %v153 = vld [vmem:[#allocation6 + $0x150] sm:$0xff]
    %v154 = vld [vmem:[#allocation6 + $0x158] sm:$0xff]
    %v155 = vld [vmem:[#allocation6 + $0x160] sm:$0xff]
    %v156 = vld [vmem:[#allocation6 + $0x168] sm:$0xff]
    %v157 = vld [vmem:[#allocation6 + $0x170] sm:$0xff]
    %v158 = vld [vmem:[#allocation6 + $0x178] sm:$0xff]
    %v159 = vld [vmem:[%s2] sm:$0x1]
    %v161 = vperm.slane %v159, 0
    %v163 = vand.u32 %v126, 4294901760
    %164 = vmatpush.msra.mxu0 %v163
    %v165 = vand.u32 %v125, 4294901760
    %166 = vmatpush.msra.mxu0 %v165
    %v167 = vand.u32 %v124, 4294901760
    %168 = vmatpush.msra.mxu0 %v167
    %v169 = vand.u32 %v123, 4294901760
    %170 = vmatpush.msra.mxu0 %v169
    %v171 = vand.u32 %v122, 4294901760
    %172 = vmatpush.msra.mxu0 %v171
    %v173 = vand.u32 %v121, 4294901760
    %174 = vmatpush.msra.mxu0 %v173
    %v175 = vand.u32 %v120, 4294901760
    %176 = vmatpush.msra.mxu0 %v175
    %v177 = vand.u32 %v119, 4294901760
    %178 = vmatpush.msra.mxu0 %v177
    %v179 = vand.u32 %v118, 4294901760
    %180 = vmatpush.msra.mxu0 %v179
    %v181 = vand.u32 %v117, 4294901760
    %182 = vmatpush.msra.mxu0 %v181
    %v183 = vand.u32 %v116, 4294901760
    %184 = vmatpush.msra.mxu0 %v183
    %v185 = vand.u32 %v115, 4294901760
    %186 = vmatpush.msra.mxu0 %v185
    %v187 = vand.u32 %v114, 4294901760
    %188 = vmatpush.msra.mxu0 %v187
    %v189 = vand.u32 %v113, 4294901760
    %190 = vmatpush.msra.mxu0 %v189
    %v191 = vand.u32 %v112, 4294901760
    %192 = vmatpush.msra.mxu0 %v191
    %v193 = vand.u32 %v111, 4294901760
    %194 = vmatpush.msra.mxu0 %v193
    %v195 = vand.u32 %v102, 4294901760
    %v196 = vsub.f32 %v102, %v195
    %v197 = vand.u32 %v196, 4294901760
    %v198 = vsub.f32 %v196, %v197
    %v199 = vand.u32 %v198, 4294901760
    %200 = vmatmul.f32.gmra.mxu0 %v199
    %v201 = vpop.f32.mrf.mxu0
    %v202 = vadd.f32 %v161, %v201
    %v203 = vand.u32 %v103, 4294901760
    %v204 = vsub.f32 %v103, %v203
    %v205 = vand.u32 %v204, 4294901760
    %v206 = vsub.f32 %v204, %v205
    %v207 = vand.u32 %v206, 4294901760
    %208 = vmatmul.f32.gmra.mxu0 %v207
    %v209 = vpop.f32.mrf.mxu0
    %v210 = vadd.f32 %v161, %v209
    %211 = vdwg.mxu0
    %v212 = vand.u32 %v126, 4294901760
    %v213 = vsub.f32 %v126, %v212
    %v214 = vand.u32 %v213, 4294901760
    %v215 = vsub.f32 %v213, %v214
    %v216 = vand.u32 %v215, 4294901760
    %217 = vmatpush.msra.mxu0 %v216
    %v218 = vand.u32 %v125, 4294901760
    %v219 = vsub.f32 %v125, %v218
    %v220 = vand.u32 %v219, 4294901760
    %v221 = vsub.f32 %v219, %v220
    %v222 = vand.u32 %v221, 4294901760
    %223 = vmatpush.msra.mxu0 %v222
    %v224 = vand.u32 %v124, 4294901760
    %v225 = vsub.f32 %v124, %v224
    %v226 = vand.u32 %v225, 4294901760
    %v227 = vsub.f32 %v225, %v226
    %v228 = vand.u32 %v227, 4294901760
    %229 = vmatpush.msra.mxu0 %v228
    %v230 = vand.u32 %v123, 4294901760
    %v231 = vsub.f32 %v123, %v230
    %v232 = vand.u32 %v231, 4294901760
    %v233 = vsub.f32 %v231, %v232
    %v234 = vand.u32 %v233, 4294901760
    %235 = vmatpush.msra.mxu0 %v234
    %v236 = vand.u32 %v122, 4294901760
    %v237 = vsub.f32 %v122, %v236
    %v238 = vand.u32 %v237, 4294901760
    %v239 = vsub.f32 %v237, %v238
    %v240 = vand.u32 %v239, 4294901760
    %241 = vmatpush.msra.mxu0 %v240
    %v242 = vand.u32 %v121, 4294901760
    %v243 = vsub.f32 %v121, %v242
    %v244 = vand.u32 %v243, 4294901760
    %v245 = vsub.f32 %v243, %v244
    %v246 = vand.u32 %v245, 4294901760
    %247 = vmatpush.msra.mxu0 %v246
    %v248 = vand.u32 %v120, 4294901760
    %v249 = vsub.f32 %v120, %v248
    %v250 = vand.u32 %v249, 4294901760
    %v251 = vsub.f32 %v249, %v250
    %v252 = vand.u32 %v251, 4294901760
    %253 = vmatpush.msra.mxu0 %v252
    %v254 = vand.u32 %v119, 4294901760
    %v255 = vsub.f32 %v119, %v254
    %v256 = vand.u32 %v255, 4294901760
    %v257 = vsub.f32 %v255, %v256
    %v258 = vand.u32 %v257, 4294901760
    %259 = vmatpush.msra.mxu0 %v258
    %v260 = vand.u32 %v118, 4294901760
    %v261 = vsub.f32 %v118, %v260
    %v262 = vand.u32 %v261, 4294901760
    %v263 = vsub.f32 %v261, %v262
    %v264 = vand.u32 %v263, 4294901760
    %265 = vmatpush.msra.mxu0 %v264
    %v266 = vand.u32 %v117, 4294901760
    %v267 = vsub.f32 %v117, %v266
    %v268 = vand.u32 %v267, 4294901760
    %v269 = vsub.f32 %v267, %v268
    %v270 = vand.u32 %v269, 4294901760
    %271 = vmatpush.msra.mxu0 %v270
    %v272 = vand.u32 %v116, 4294901760
    %v273 = vsub.f32 %v116, %v272
    %v274 = vand.u32 %v273, 4294901760
    %v275 = vsub.f32 %v273, %v274
    %v276 = vand.u32 %v275, 4294901760
    %277 = vmatpush.msra.mxu0 %v276
    %v278 = vand.u32 %v115, 4294901760
    %v279 = vsub.f32 %v115, %v278
    %v280 = vand.u32 %v279, 4294901760
    %v281 = vsub.f32 %v279, %v280
    %v282 = vand.u32 %v281, 4294901760
    %283 = vmatpush.msra.mxu0 %v282
    %v284 = vand.u32 %v114, 4294901760
    %v285 = vsub.f32 %v114, %v284
    %v286 = vand.u32 %v285, 4294901760
    %v287 = vsub.f32 %v285, %v286
    %v288 = vand.u32 %v287, 4294901760
    %289 = vmatpush.msra.mxu0 %v288
    %v290 = vand.u32 %v113, 4294901760
    %v291 = vsub.f32 %v113, %v290
    %v292 = vand.u32 %v291, 4294901760
    %v293 = vsub.f32 %v291, %v292
    %v294 = vand.u32 %v293, 4294901760
    %295 = vmatpush.msra.mxu0 %v294
    %v296 = vand.u32 %v112, 4294901760
    %v297 = vsub.f32 %v112, %v296
    %v298 = vand.u32 %v297, 4294901760
    %v299 = vsub.f32 %v297, %v298
    %v300 = vand.u32 %v299, 4294901760
    %301 = vmatpush.msra.mxu0 %v300
    %v302 = vand.u32 %v111, 4294901760
    %v303 = vsub.f32 %v111, %v302
    %v304 = vand.u32 %v303, 4294901760
    %v305 = vsub.f32 %v303, %v304
    %v306 = vand.u32 %v305, 4294901760
    %307 = vmatpush.msra.mxu0 %v306
    %v308 = vand.u32 %v102, 4294901760
    %309 = vmatmul.f32.gmra.mxu0 %v308
    %v310 = vpop.f32.mrf.mxu0
    %v311 = vadd.f32 %v202, %v310
    %v312 = vand.u32 %v103, 4294901760
    %313 = vmatmul.f32.gmra.mxu0 %v312
    %v314 = vpop.f32.mrf.mxu0
    %v315 = vadd.f32 %v210, %v314
    %316 = vdwg.mxu0
    %v317 = vand.u32 %v126, 4294901760
    %v318 = vsub.f32 %v126, %v317
    %319 = vmatpush.msra.mxu0 %v318
    %v320 = vand.u32 %v125, 4294901760
    %v321 = vsub.f32 %v125, %v320
    %322 = vmatpush.msra.mxu0 %v321
    %v323 = vand.u32 %v124, 4294901760
    %v324 = vsub.f32 %v124, %v323
    %325 = vmatpush.msra.mxu0 %v324
    %v326 = vand.u32 %v123, 4294901760
    %v327 = vsub.f32 %v123, %v326
    %328 = vmatpush.msra.mxu0 %v327
    %v329 = vand.u32 %v122, 4294901760
    %v330 = vsub.f32 %v122, %v329
    %331 = vmatpush.msra.mxu0 %v330
    %v332 = vand.u32 %v121, 4294901760
    %v333 = vsub.f32 %v121, %v332
    %334 = vmatpush.msra.mxu0 %v333
    %v335 = vand.u32 %v120, 4294901760
    %v336 = vsub.f32 %v120, %v335
    %337 = vmatpush.msra.mxu0 %v336
    %v338 = vand.u32 %v119, 4294901760
    %v339 = vsub.f32 %v119, %v338
    %340 = vmatpush.msra.mxu0 %v339
    %v341 = vand.u32 %v118, 4294901760
    %v342 = vsub.f32 %v118, %v341
    %343 = vmatpush.msra.mxu0 %v342
    %v344 = vand.u32 %v117, 4294901760
    %v345 = vsub.f32 %v117, %v344
    %346 = vmatpush.msra.mxu0 %v345
    %v347 = vand.u32 %v116, 4294901760
    %v348 = vsub.f32 %v116, %v347
    %349 = vmatpush.msra.mxu0 %v348
    %v350 = vand.u32 %v115, 4294901760
    %v351 = vsub.f32 %v115, %v350
    %352 = vmatpush.msra.mxu0 %v351
    %v353 = vand.u32 %v114, 4294901760
    %v354 = vsub.f32 %v114, %v353
    %355 = vmatpush.msra.mxu0 %v354
    %v356 = vand.u32 %v113, 4294901760
    %v357 = vsub.f32 %v113, %v356
    %358 = vmatpush.msra.mxu0 %v357
    %v359 = vand.u32 %v112, 4294901760
    %v360 = vsub.f32 %v112, %v359
    %361 = vmatpush.msra.mxu0 %v360
    %v362 = vand.u32 %v111, 4294901760
    %v363 = vsub.f32 %v111, %v362
    %364 = vmatpush.msra.mxu0 %v363
    %v365 = vand.u32 %v102, 4294901760
    %v366 = vsub.f32 %v102, %v365
    %367 = vmatmul.f32.gmra.mxu0 %v366
    %v368 = vpop.f32.mrf.mxu0
    %v369 = vadd.f32 %v311, %v368
    %v370 = vand.u32 %v103, 4294901760
    %v371 = vsub.f32 %v103, %v370
    %372 = vmatmul.f32.gmra.mxu0 %v371
    %v373 = vpop.f32.mrf.mxu0
    %v374 = vadd.f32 %v315, %v373
    %375 = vdwg.mxu0
    %v376 = vand.u32 %v126, 4294901760
    %377 = vmatpush.msra.mxu0 %v376
    %v378 = vand.u32 %v125, 4294901760
    %379 = vmatpush.msra.mxu0 %v378
    %v380 = vand.u32 %v124, 4294901760
    %381 = vmatpush.msra.mxu0 %v380
    %v382 = vand.u32 %v123, 4294901760
    %383 = vmatpush.msra.mxu0 %v382
    %v384 = vand.u32 %v122, 4294901760
    %385 = vmatpush.msra.mxu0 %v384
    %v386 = vand.u32 %v121, 4294901760
    %387 = vmatpush.msra.mxu0 %v386
    %v388 = vand.u32 %v120, 4294901760
    %389 = vmatpush.msra.mxu0 %v388
    %v390 = vand.u32 %v119, 4294901760
    %391 = vmatpush.msra.mxu0 %v390
    %v392 = vand.u32 %v118, 4294901760
    %393 = vmatpush.msra.mxu0 %v392
    %v394 = vand.u32 %v117, 4294901760
    %395 = vmatpush.msra.mxu0 %v394
    %v396 = vand.u32 %v116, 4294901760
    %397 = vmatpush.msra.mxu0 %v396
    %v398 = vand.u32 %v115, 4294901760
    %399 = vmatpush.msra.mxu0 %v398
    %v400 = vand.u32 %v114, 4294901760
    %401 = vmatpush.msra.mxu0 %v400
    %v402 = vand.u32 %v113, 4294901760
    %403 = vmatpush.msra.mxu0 %v402
    %v404 = vand.u32 %v112, 4294901760
    %405 = vmatpush.msra.mxu0 %v404
    %v406 = vand.u32 %v111, 4294901760
    %407 = vmatpush.msra.mxu0 %v406
    %v408 = vand.u32 %v102, 4294901760
    %v409 = vsub.f32 %v102, %v408
    %v410 = vand.u32 %v409, 4294901760
    %411 = vmatmul.f32.gmra.mxu0 %v410
    %v412 = vpop.f32.mrf.mxu0
    %v413 = vadd.f32 %v369, %v412
    %v414 = vand.u32 %v103, 4294901760
    %v415 = vsub.f32 %v103, %v414
    %v416 = vand.u32 %v415, 4294901760
    %417 = vmatmul.f32.gmra.mxu0 %v416
    %v418 = vpop.f32.mrf.mxu0
    %v419 = vadd.f32 %v374, %v418
    %420 = vdwg.mxu0
    %v421 = vand.u32 %v126, 4294901760
    %v422 = vsub.f32 %v126, %v421
    %v423 = vand.u32 %v422, 4294901760
    %424 = vmatpush.msra.mxu0 %v423
    %v425 = vand.u32 %v125, 4294901760
    %v426 = vsub.f32 %v125, %v425
    %v427 = vand.u32 %v426, 4294901760
    %428 = vmatpush.msra.mxu0 %v427
    %v429 = vand.u32 %v124, 4294901760
    %v430 = vsub.f32 %v124, %v429
    %v431 = vand.u32 %v430, 4294901760
    %432 = vmatpush.msra.mxu0 %v431
    %v433 = vand.u32 %v123, 4294901760
    %v434 = vsub.f32 %v123, %v433
    %v435 = vand.u32 %v434, 4294901760
    %436 = vmatpush.msra.mxu0 %v435
    %v437 = vand.u32 %v122, 4294901760
    %v438 = vsub.f32 %v122, %v437
    %v439 = vand.u32 %v438, 4294901760
    %440 = vmatpush.msra.mxu0 %v439
    %v441 = vand.u32 %v121, 4294901760
    %v442 = vsub.f32 %v121, %v441
    %v443 = vand.u32 %v442, 4294901760
    %444 = vmatpush.msra.mxu0 %v443
    %v445 = vand.u32 %v120, 4294901760
    %v446 = vsub.f32 %v120, %v445
    %v447 = vand.u32 %v446, 4294901760
    %448 = vmatpush.msra.mxu0 %v447
    %v449 = vand.u32 %v119, 4294901760
    %v450 = vsub.f32 %v119, %v449
    %v451 = vand.u32 %v450, 4294901760
    %452 = vmatpush.msra.mxu0 %v451
    %v453 = vand.u32 %v118, 4294901760
    %v454 = vsub.f32 %v118, %v453
    %v455 = vand.u32 %v454, 4294901760
    %456 = vmatpush.msra.mxu0 %v455
    %v457 = vand.u32 %v117, 4294901760
    %v458 = vsub.f32 %v117, %v457
    %v459 = vand.u32 %v458, 4294901760
    %460 = vmatpush.msra.mxu0 %v459
    %v461 = vand.u32 %v116, 4294901760
    %v462 = vsub.f32 %v116, %v461
    %v463 = vand.u32 %v462, 4294901760
    %464 = vmatpush.msra.mxu0 %v463
    %v465 = vand.u32 %v115, 4294901760
    %v466 = vsub.f32 %v115, %v465
    %v467 = vand.u32 %v466, 4294901760
    %468 = vmatpush.msra.mxu0 %v467
    %v469 = vand.u32 %v114, 4294901760
    %v470 = vsub.f32 %v114, %v469
    %v471 = vand.u32 %v470, 4294901760
    %472 = vmatpush.msra.mxu0 %v471
    %v473 = vand.u32 %v113, 4294901760
    %v474 = vsub.f32 %v113, %v473
    %v475 = vand.u32 %v474, 4294901760
    %476 = vmatpush.msra.mxu0 %v475
    %v477 = vand.u32 %v112, 4294901760
    %v478 = vsub.f32 %v112, %v477
    %v479 = vand.u32 %v478, 4294901760
    %480 = vmatpush.msra.mxu0 %v479
    %v481 = vand.u32 %v111, 4294901760
    %v482 = vsub.f32 %v111, %v481
    %v483 = vand.u32 %v482, 4294901760
    %484 = vmatpush.msra.mxu0 %v483
    %v485 = vand.u32 %v102, 4294901760
    %486 = vmatmul.f32.gmra.mxu0 %v485
    %v487 = vpop.f32.mrf.mxu0
    %v488 = vadd.f32 %v413, %v487
    %v489 = vand.u32 %v103, 4294901760
    %490 = vmatmul.f32.gmra.mxu0 %v489
    %v491 = vpop.f32.mrf.mxu0
    %v492 = vadd.f32 %v419, %v491
    %493 = vdwg.mxu0
    %v494 = vand.u32 %v126, 4294901760
    %495 = vmatpush.msra.mxu0 %v494
    %v496 = vand.u32 %v125, 4294901760
    %497 = vmatpush.msra.mxu0 %v496
    %v498 = vand.u32 %v124, 4294901760
    %499 = vmatpush.msra.mxu0 %v498
    %v500 = vand.u32 %v123, 4294901760
    %501 = vmatpush.msra.mxu0 %v500
    %v502 = vand.u32 %v122, 4294901760
    %503 = vmatpush.msra.mxu0 %v502
    %v504 = vand.u32 %v121, 4294901760
    %505 = vmatpush.msra.mxu0 %v504
    %v506 = vand.u32 %v120, 4294901760
    %507 = vmatpush.msra.mxu0 %v506
    %v508 = vand.u32 %v119, 4294901760
    %509 = vmatpush.msra.mxu0 %v508
    %v510 = vand.u32 %v118, 4294901760
    %511 = vmatpush.msra.mxu0 %v510
    %v512 = vand.u32 %v117, 4294901760
    %513 = vmatpush.msra.mxu0 %v512
    %v514 = vand.u32 %v116, 4294901760
    %515 = vmatpush.msra.mxu0 %v514
    %v516 = vand.u32 %v115, 4294901760
    %517 = vmatpush.msra.mxu0 %v516
    %v518 = vand.u32 %v114, 4294901760
    %519 = vmatpush.msra.mxu0 %v518
    %v520 = vand.u32 %v113, 4294901760
    %521 = vmatpush.msra.mxu0 %v520
    %v522 = vand.u32 %v112, 4294901760
    %523 = vmatpush.msra.mxu0 %v522
    %v524 = vand.u32 %v111, 4294901760
    %525 = vmatpush.msra.mxu0 %v524
    %v526 = vand.u32 %v102, 4294901760
    %527 = vmatmul.f32.gmra.mxu0 %v526
    %v528 = vpop.f32.mrf.mxu0
    %v529 = vadd.f32 %v488, %v528
    %v530 = vand.u32 %v103, 4294901760
    %531 = vmatmul.f32.gmra.mxu0 %v530
    %v532 = vpop.f32.mrf.mxu0
    %v533 = vadd.f32 %v492, %v532
    %534 = vdwg.mxu0
    %v535 = vand.u32 %v142, 4294901760
    %536 = vmatpush.msra.mxu0 %v535
    %v537 = vand.u32 %v141, 4294901760
    %538 = vmatpush.msra.mxu0 %v537
    %v539 = vand.u32 %v140, 4294901760
    %540 = vmatpush.msra.mxu0 %v539
    %v541 = vand.u32 %v139, 4294901760
    %542 = vmatpush.msra.mxu0 %v541
    %v543 = vand.u32 %v138, 4294901760
    %544 = vmatpush.msra.mxu0 %v543
    %v545 = vand.u32 %v137, 4294901760
    %546 = vmatpush.msra.mxu0 %v545
    %v547 = vand.u32 %v136, 4294901760
    %548 = vmatpush.msra.mxu0 %v547
    %v549 = vand.u32 %v135, 4294901760
    %550 = vmatpush.msra.mxu0 %v549
    %v551 = vand.u32 %v134, 4294901760
    %552 = vmatpush.msra.mxu0 %v551
    %v553 = vand.u32 %v133, 4294901760
    %554 = vmatpush.msra.mxu0 %v553
    %v555 = vand.u32 %v132, 4294901760
    %556 = vmatpush.msra.mxu0 %v555
    %v557 = vand.u32 %v131, 4294901760
    %558 = vmatpush.msra.mxu0 %v557
    %v559 = vand.u32 %v130, 4294901760
    %560 = vmatpush.msra.mxu0 %v559
    %v561 = vand.u32 %v129, 4294901760
    %562 = vmatpush.msra.mxu0 %v561
    %v563 = vand.u32 %v128, 4294901760
    %564 = vmatpush.msra.mxu0 %v563
    %v565 = vand.u32 %v127, 4294901760
    %566 = vmatpush.msra.mxu0 %v565
    %v567 = vand.u32 %v93, 4294901760
    %v568 = vsub.f32 %v93, %v567
    %v569 = vand.u32 %v568, 4294901760
    %v570 = vsub.f32 %v568, %v569
    %v571 = vand.u32 %v570, 4294901760
    %572 = vmatmul.f32.gmra.mxu0 %v571
    %v573 = vpop.f32.mrf.mxu0
    %v574 = vadd.f32 %v529, %v573
    %v575 = vand.u32 %v94, 4294901760
    %v576 = vsub.f32 %v94, %v575
    %v577 = vand.u32 %v576, 4294901760
    %v578 = vsub.f32 %v576, %v577
    %v579 = vand.u32 %v578, 4294901760
    %580 = vmatmul.f32.gmra.mxu0 %v579
    %v581 = vpop.f32.mrf.mxu0
    %v582 = vadd.f32 %v533, %v581
    %583 = vdwg.mxu0
    %v584 = vand.u32 %v142, 4294901760
    %v585 = vsub.f32 %v142, %v584
    %v586 = vand.u32 %v585, 4294901760
    %v587 = vsub.f32 %v585, %v586
    %v588 = vand.u32 %v587, 4294901760
    %589 = vmatpush.msra.mxu0 %v588
    %v590 = vand.u32 %v141, 4294901760
    %v591 = vsub.f32 %v141, %v590
    %v592 = vand.u32 %v591, 4294901760
    %v593 = vsub.f32 %v591, %v592
    %v594 = vand.u32 %v593, 4294901760
    %595 = vmatpush.msra.mxu0 %v594
    %v596 = vand.u32 %v140, 4294901760
    %v597 = vsub.f32 %v140, %v596
    %v598 = vand.u32 %v597, 4294901760
    %v599 = vsub.f32 %v597, %v598
    %v600 = vand.u32 %v599, 4294901760
    %601 = vmatpush.msra.mxu0 %v600
    %v602 = vand.u32 %v139, 4294901760
    %v603 = vsub.f32 %v139, %v602
    %v604 = vand.u32 %v603, 4294901760
    %v605 = vsub.f32 %v603, %v604
    %v606 = vand.u32 %v605, 4294901760
    %607 = vmatpush.msra.mxu0 %v606
    %v608 = vand.u32 %v138, 4294901760
    %v609 = vsub.f32 %v138, %v608
    %v610 = vand.u32 %v609, 4294901760
    %v611 = vsub.f32 %v609, %v610
    %v612 = vand.u32 %v611, 4294901760
    %613 = vmatpush.msra.mxu0 %v612
    %v614 = vand.u32 %v137, 4294901760
    %v615 = vsub.f32 %v137, %v614
    %v616 = vand.u32 %v615, 4294901760
    %v617 = vsub.f32 %v615, %v616
    %v618 = vand.u32 %v617, 4294901760
    %619 = vmatpush.msra.mxu0 %v618
    %v620 = vand.u32 %v136, 4294901760
    %v621 = vsub.f32 %v136, %v620
    %v622 = vand.u32 %v621, 4294901760
    %v623 = vsub.f32 %v621, %v622
    %v624 = vand.u32 %v623, 4294901760
    %625 = vmatpush.msra.mxu0 %v624
    %v626 = vand.u32 %v135, 4294901760
    %v627 = vsub.f32 %v135, %v626
    %v628 = vand.u32 %v627, 4294901760
    %v629 = vsub.f32 %v627, %v628
    %v630 = vand.u32 %v629, 4294901760
    %631 = vmatpush.msra.mxu0 %v630
    %v632 = vand.u32 %v134, 4294901760
    %v633 = vsub.f32 %v134, %v632
    %v634 = vand.u32 %v633, 4294901760
    %v635 = vsub.f32 %v633, %v634
    %v636 = vand.u32 %v635, 4294901760
    %637 = vmatpush.msra.mxu0 %v636
    %v638 = vand.u32 %v133, 4294901760
    %v639 = vsub.f32 %v133, %v638
    %v640 = vand.u32 %v639, 4294901760
    %v641 = vsub.f32 %v639, %v640
    %v642 = vand.u32 %v641, 4294901760
    %643 = vmatpush.msra.mxu0 %v642
    %v644 = vand.u32 %v132, 4294901760
    %v645 = vsub.f32 %v132, %v644
    %v646 = vand.u32 %v645, 4294901760
    %v647 = vsub.f32 %v645, %v646
    %v648 = vand.u32 %v647, 4294901760
    %649 = vmatpush.msra.mxu0 %v648
    %v650 = vand.u32 %v131, 4294901760
    %v651 = vsub.f32 %v131, %v650
    %v652 = vand.u32 %v651, 4294901760
    %v653 = vsub.f32 %v651, %v652
    %v654 = vand.u32 %v653, 4294901760
    %655 = vmatpush.msra.mxu0 %v654
    %v656 = vand.u32 %v130, 4294901760
    %v657 = vsub.f32 %v130, %v656
    %v658 = vand.u32 %v657, 4294901760
    %v659 = vsub.f32 %v657, %v658
    %v660 = vand.u32 %v659, 4294901760
    %661 = vmatpush.msra.mxu0 %v660
    %v662 = vand.u32 %v129, 4294901760
    %v663 = vsub.f32 %v129, %v662
    %v664 = vand.u32 %v663, 4294901760
    %v665 = vsub.f32 %v663, %v664
    %v666 = vand.u32 %v665, 4294901760
    %667 = vmatpush.msra.mxu0 %v666
    %v668 = vand.u32 %v128, 4294901760
    %v669 = vsub.f32 %v128, %v668
    %v670 = vand.u32 %v669, 4294901760
    %v671 = vsub.f32 %v669, %v670
    %v672 = vand.u32 %v671, 4294901760
    %673 = vmatpush.msra.mxu0 %v672
    %v674 = vand.u32 %v127, 4294901760
    %v675 = vsub.f32 %v127, %v674
    %v676 = vand.u32 %v675, 4294901760
    %v677 = vsub.f32 %v675, %v676
    %v678 = vand.u32 %v677, 4294901760
    %679 = vmatpush.msra.mxu0 %v678
    %v680 = vand.u32 %v93, 4294901760
    %681 = vmatmul.f32.gmra.mxu0 %v680
    %v682 = vpop.f32.mrf.mxu0
    %v683 = vadd.f32 %v574, %v682
    %v684 = vand.u32 %v94, 4294901760
    %685 = vmatmul.f32.gmra.mxu0 %v684
    %v686 = vpop.f32.mrf.mxu0
    %v687 = vadd.f32 %v582, %v686
    %688 = vdwg.mxu0
    %v689 = vand.u32 %v142, 4294901760
    %v690 = vsub.f32 %v142, %v689
    %691 = vmatpush.msra.mxu0 %v690
    %v692 = vand.u32 %v141, 4294901760
    %v693 = vsub.f32 %v141, %v692
    %694 = vmatpush.msra.mxu0 %v693
    %v695 = vand.u32 %v140, 4294901760
    %v696 = vsub.f32 %v140, %v695
    %697 = vmatpush.msra.mxu0 %v696
    %v698 = vand.u32 %v139, 4294901760
    %v699 = vsub.f32 %v139, %v698
    %700 = vmatpush.msra.mxu0 %v699
    %v701 = vand.u32 %v138, 4294901760
    %v702 = vsub.f32 %v138, %v701
    %703 = vmatpush.msra.mxu0 %v702
    %v704 = vand.u32 %v137, 4294901760
    %v705 = vsub.f32 %v137, %v704
    %706 = vmatpush.msra.mxu0 %v705
    %v707 = vand.u32 %v136, 4294901760
    %v708 = vsub.f32 %v136, %v707
    %709 = vmatpush.msra.mxu0 %v708
    %v710 = vand.u32 %v135, 4294901760
    %v711 = vsub.f32 %v135, %v710
    %712 = vmatpush.msra.mxu0 %v711
    %v713 = vand.u32 %v134, 4294901760
    %v714 = vsub.f32 %v134, %v713
    %715 = vmatpush.msra.mxu0 %v714
    %v716 = vand.u32 %v133, 4294901760
    %v717 = vsub.f32 %v133, %v716
    %718 = vmatpush.msra.mxu0 %v717
    %v719 = vand.u32 %v132, 4294901760
    %v720 = vsub.f32 %v132, %v719
    %721 = vmatpush.msra.mxu0 %v720
    %v722 = vand.u32 %v131, 4294901760
    %v723 = vsub.f32 %v131, %v722
    %724 = vmatpush.msra.mxu0 %v723
    %v725 = vand.u32 %v130, 4294901760
    %v726 = vsub.f32 %v130, %v725
    %727 = vmatpush.msra.mxu0 %v726
    %v728 = vand.u32 %v129, 4294901760
    %v729 = vsub.f32 %v129, %v728
    %730 = vmatpush.msra.mxu0 %v729
    %v731 = vand.u32 %v128, 4294901760
    %v732 = vsub.f32 %v128, %v731
    %733 = vmatpush.msra.mxu0 %v732
    %v734 = vand.u32 %v127, 4294901760
    %v735 = vsub.f32 %v127, %v734
    %736 = vmatpush.msra.mxu0 %v735
    %v737 = vand.u32 %v93, 4294901760
    %v738 = vsub.f32 %v93, %v737
    %739 = vmatmul.f32.gmra.mxu0 %v738
    %v740 = vpop.f32.mrf.mxu0
    %v741 = vadd.f32 %v683, %v740
    %v742 = vand.u32 %v94, 4294901760
    %v743 = vsub.f32 %v94, %v742
    %744 = vmatmul.f32.gmra.mxu0 %v743
    %v745 = vpop.f32.mrf.mxu0
    %v746 = vadd.f32 %v687, %v745
    %747 = vdwg.mxu0
    %v748 = vand.u32 %v142, 4294901760
    %749 = vmatpush.msra.mxu0 %v748
    %v750 = vand.u32 %v141, 4294901760
    %751 = vmatpush.msra.mxu0 %v750
    %v752 = vand.u32 %v140, 4294901760
    %753 = vmatpush.msra.mxu0 %v752
    %v754 = vand.u32 %v139, 4294901760
    %755 = vmatpush.msra.mxu0 %v754
    %v756 = vand.u32 %v138, 4294901760
    %757 = vmatpush.msra.mxu0 %v756
    %v758 = vand.u32 %v137, 4294901760
    %759 = vmatpush.msra.mxu0 %v758
    %v760 = vand.u32 %v136, 4294901760
    %761 = vmatpush.msra.mxu0 %v760
    %v762 = vand.u32 %v135, 4294901760
    %763 = vmatpush.msra.mxu0 %v762
    %v764 = vand.u32 %v134, 4294901760
    %765 = vmatpush.msra.mxu0 %v764
    %v766 = vand.u32 %v133, 4294901760
    %767 = vmatpush.msra.mxu0 %v766
    %v768 = vand.u32 %v132, 4294901760
    %769 = vmatpush.msra.mxu0 %v768
    %v770 = vand.u32 %v131, 4294901760
    %771 = vmatpush.msra.mxu0 %v770
    %v772 = vand.u32 %v130, 4294901760
    %773 = vmatpush.msra.mxu0 %v772
    %v774 = vand.u32 %v129, 4294901760
    %775 = vmatpush.msra.mxu0 %v774
    %v776 = vand.u32 %v128, 4294901760
    %777 = vmatpush.msra.mxu0 %v776
    %v778 = vand.u32 %v127, 4294901760
    %779 = vmatpush.msra.mxu0 %v778
    %v780 = vand.u32 %v93, 4294901760
    %v781 = vsub.f32 %v93, %v780
    %v782 = vand.u32 %v781, 4294901760
    %783 = vmatmul.f32.gmra.mxu0 %v782
    %v784 = vpop.f32.mrf.mxu0
    %v785 = vadd.f32 %v741, %v784
    %v786 = vand.u32 %v94, 4294901760
    %v787 = vsub.f32 %v94, %v786
    %v788 = vand.u32 %v787, 4294901760
    %789 = vmatmul.f32.gmra.mxu0 %v788
    %v790 = vpop.f32.mrf.mxu0
    %v791 = vadd.f32 %v746, %v790
    %792 = vdwg.mxu0
    %v793 = vand.u32 %v142, 4294901760
    %v794 = vsub.f32 %v142, %v793
    %v795 = vand.u32 %v794, 4294901760
    %796 = vmatpush.msra.mxu0 %v795
    %v797 = vand.u32 %v141, 4294901760
    %v798 = vsub.f32 %v141, %v797
    %v799 = vand.u32 %v798, 4294901760
    %800 = vmatpush.msra.mxu0 %v799
    %v801 = vand.u32 %v140, 4294901760
    %v802 = vsub.f32 %v140, %v801
    %v803 = vand.u32 %v802, 4294901760
    %804 = vmatpush.msra.mxu0 %v803
    %v805 = vand.u32 %v139, 4294901760
    %v806 = vsub.f32 %v139, %v805
    %v807 = vand.u32 %v806, 4294901760
    %808 = vmatpush.msra.mxu0 %v807
    %v809 = vand.u32 %v138, 4294901760
    %v810 = vsub.f32 %v138, %v809
    %v811 = vand.u32 %v810, 4294901760
    %812 = vmatpush.msra.mxu0 %v811
    %v813 = vand.u32 %v137, 4294901760
    %v814 = vsub.f32 %v137, %v813
    %v815 = vand.u32 %v814, 4294901760
    %816 = vmatpush.msra.mxu0 %v815
    %v817 = vand.u32 %v136, 4294901760
    %v818 = vsub.f32 %v136, %v817
    %v819 = vand.u32 %v818, 4294901760
    %820 = vmatpush.msra.mxu0 %v819
    %v821 = vand.u32 %v135, 4294901760
    %v822 = vsub.f32 %v135, %v821
    %v823 = vand.u32 %v822, 4294901760
    %824 = vmatpush.msra.mxu0 %v823
    %v825 = vand.u32 %v134, 4294901760
    %v826 = vsub.f32 %v134, %v825
    %v827 = vand.u32 %v826, 4294901760
    %828 = vmatpush.msra.mxu0 %v827
    %v829 = vand.u32 %v133, 4294901760
    %v830 = vsub.f32 %v133, %v829
    %v831 = vand.u32 %v830, 4294901760
    %832 = vmatpush.msra.mxu0 %v831
    %v833 = vand.u32 %v132, 4294901760
    %v834 = vsub.f32 %v132, %v833
    %v835 = vand.u32 %v834, 4294901760
    %836 = vmatpush.msra.mxu0 %v835
    %v837 = vand.u32 %v131, 4294901760
    %v838 = vsub.f32 %v131, %v837
    %v839 = vand.u32 %v838, 4294901760
    %840 = vmatpush.msra.mxu0 %v839
    %v841 = vand.u32 %v130, 4294901760
    %v842 = vsub.f32 %v130, %v841
    %v843 = vand.u32 %v842, 4294901760
    %844 = vmatpush.msra.mxu0 %v843
    %v845 = vand.u32 %v129, 4294901760
    %v846 = vsub.f32 %v129, %v845
    %v847 = vand.u32 %v846, 4294901760
    %848 = vmatpush.msra.mxu0 %v847
    %v849 = vand.u32 %v128, 4294901760
    %v850 = vsub.f32 %v128, %v849
    %v851 = vand.u32 %v850, 4294901760
    %852 = vmatpush.msra.mxu0 %v851
    %v853 = vand.u32 %v127, 4294901760
    %v854 = vsub.f32 %v127, %v853
    %v855 = vand.u32 %v854, 4294901760
    %856 = vmatpush.msra.mxu0 %v855
    %v857 = vand.u32 %v93, 4294901760
    %858 = vmatmul.f32.gmra.mxu0 %v857
    %v859 = vpop.f32.mrf.mxu0
    %v860 = vadd.f32 %v785, %v859
    %v861 = vand.u32 %v94, 4294901760
    %862 = vmatmul.f32.gmra.mxu0 %v861
    %v863 = vpop.f32.mrf.mxu0
    %v864 = vadd.f32 %v791, %v863
    %865 = vdwg.mxu0
    %v866 = vand.u32 %v142, 4294901760
    %867 = vmatpush.msra.mxu0 %v866
    %v868 = vand.u32 %v141, 4294901760
    %869 = vmatpush.msra.mxu0 %v868
    %v870 = vand.u32 %v140, 4294901760
    %871 = vmatpush.msra.mxu0 %v870
    %v872 = vand.u32 %v139, 4294901760
    %873 = vmatpush.msra.mxu0 %v872
    %v874 = vand.u32 %v138, 4294901760
    %875 = vmatpush.msra.mxu0 %v874
    %v876 = vand.u32 %v137, 4294901760
    %877 = vmatpush.msra.mxu0 %v876
    %v878 = vand.u32 %v136, 4294901760
    %879 = vmatpush.msra.mxu0 %v878
    %v880 = vand.u32 %v135, 4294901760
    %881 = vmatpush.msra.mxu0 %v880
    %v882 = vand.u32 %v134, 4294901760
    %883 = vmatpush.msra.mxu0 %v882
    %v884 = vand.u32 %v133, 4294901760
    %885 = vmatpush.msra.mxu0 %v884
    %v886 = vand.u32 %v132, 4294901760
    %887 = vmatpush.msra.mxu0 %v886
    %v888 = vand.u32 %v131, 4294901760
    %889 = vmatpush.msra.mxu0 %v888
    %v890 = vand.u32 %v130, 4294901760
    %891 = vmatpush.msra.mxu0 %v890
    %v892 = vand.u32 %v129, 4294901760
    %893 = vmatpush.msra.mxu0 %v892
    %v894 = vand.u32 %v128, 4294901760
    %895 = vmatpush.msra.mxu0 %v894
    %v896 = vand.u32 %v127, 4294901760
    %897 = vmatpush.msra.mxu0 %v896
    %v898 = vand.u32 %v93, 4294901760
    %899 = vmatmul.f32.gmra.mxu0 %v898
    %v900 = vpop.f32.mrf.mxu0
    %v901 = vadd.f32 %v860, %v900
    %v902 = vand.u32 %v94, 4294901760
    %903 = vmatmul.f32.gmra.mxu0 %v902
    %v904 = vpop.f32.mrf.mxu0
    %v905 = vadd.f32 %v864, %v904
    %906 = vdwg.mxu0
    %v907 = vand.u32 %v158, 4294901760
    %908 = vmatpush.msra.mxu0 %v907
    %v909 = vand.u32 %v157, 4294901760
    %910 = vmatpush.msra.mxu0 %v909
    %v911 = vand.u32 %v156, 4294901760
    %912 = vmatpush.msra.mxu0 %v911
    %v913 = vand.u32 %v155, 4294901760
    %914 = vmatpush.msra.mxu0 %v913
    %v915 = vand.u32 %v154, 4294901760
    %916 = vmatpush.msra.mxu0 %v915
    %v917 = vand.u32 %v153, 4294901760
    %918 = vmatpush.msra.mxu0 %v917
    %v919 = vand.u32 %v152, 4294901760
    %920 = vmatpush.msra.mxu0 %v919
    %v921 = vand.u32 %v151, 4294901760
    %922 = vmatpush.msra.mxu0 %v921
    %v923 = vand.u32 %v150, 4294901760
    %924 = vmatpush.msra.mxu0 %v923
    %v925 = vand.u32 %v149, 4294901760
    %926 = vmatpush.msra.mxu0 %v925
    %v927 = vand.u32 %v148, 4294901760
    %928 = vmatpush.msra.mxu0 %v927
    %v929 = vand.u32 %v147, 4294901760
    %930 = vmatpush.msra.mxu0 %v929
    %v931 = vand.u32 %v146, 4294901760
    %932 = vmatpush.msra.mxu0 %v931
    %v933 = vand.u32 %v145, 4294901760
    %934 = vmatpush.msra.mxu0 %v933
    %v935 = vand.u32 %v144, 4294901760
    %936 = vmatpush.msra.mxu0 %v935
    %v937 = vand.u32 %v143, 4294901760
    %938 = vmatpush.msra.mxu0 %v937
    %v939 = vand.u32 %v109, 4294901760
    %v940 = vsub.f32 %v109, %v939
    %v941 = vand.u32 %v940, 4294901760
    %v942 = vsub.f32 %v940, %v941
    %v943 = vand.u32 %v942, 4294901760
    %944 = vmatmul.f32.gmra.mxu0 %v943
    %v945 = vpop.f32.mrf.mxu0
    %v946 = vadd.f32 %v901, %v945
    %v947 = vand.u32 %v110, 4294901760
    %v948 = vsub.f32 %v110, %v947
    %v949 = vand.u32 %v948, 4294901760
    %v950 = vsub.f32 %v948, %v949
    %v951 = vand.u32 %v950, 4294901760
    %952 = vmatmul.f32.gmra.mxu0 %v951
    %v953 = vpop.f32.mrf.mxu0
    %v954 = vadd.f32 %v905, %v953
    %955 = vdwg.mxu0
    %v956 = vand.u32 %v158, 4294901760
    %v957 = vsub.f32 %v158, %v956
    %v958 = vand.u32 %v957, 4294901760
    %v959 = vsub.f32 %v957, %v958
    %v960 = vand.u32 %v959, 4294901760
    %961 = vmatpush.msra.mxu0 %v960
    %v962 = vand.u32 %v157, 4294901760
    %v963 = vsub.f32 %v157, %v962
    %v964 = vand.u32 %v963, 4294901760
    %v965 = vsub.f32 %v963, %v964
    %v966 = vand.u32 %v965, 4294901760
    %967 = vmatpush.msra.mxu0 %v966
    %v968 = vand.u32 %v156, 4294901760
    %v969 = vsub.f32 %v156, %v968
    %v970 = vand.u32 %v969, 4294901760
    %v971 = vsub.f32 %v969, %v970
    %v972 = vand.u32 %v971, 4294901760
    %973 = vmatpush.msra.mxu0 %v972
    %v974 = vand.u32 %v155, 4294901760
    %v975 = vsub.f32 %v155, %v974
    %v976 = vand.u32 %v975, 4294901760
    %v977 = vsub.f32 %v975, %v976
    %v978 = vand.u32 %v977, 4294901760
    %979 = vmatpush.msra.mxu0 %v978
    %v980 = vand.u32 %v154, 4294901760
    %v981 = vsub.f32 %v154, %v980
    %v982 = vand.u32 %v981, 4294901760
    %v983 = vsub.f32 %v981, %v982
    %v984 = vand.u32 %v983, 4294901760
    %985 = vmatpush.msra.mxu0 %v984
    %v986 = vand.u32 %v153, 4294901760
    %v987 = vsub.f32 %v153, %v986
    %v988 = vand.u32 %v987, 4294901760
    %v989 = vsub.f32 %v987, %v988
    %v990 = vand.u32 %v989, 4294901760
    %991 = vmatpush.msra.mxu0 %v990
    %v992 = vand.u32 %v152, 4294901760
    %v993 = vsub.f32 %v152, %v992
    %v994 = vand.u32 %v993, 4294901760
    %v995 = vsub.f32 %v993, %v994
    %v996 = vand.u32 %v995, 4294901760
    %997 = vmatpush.msra.mxu0 %v996
    %v998 = vand.u32 %v151, 4294901760
    %v999 = vsub.f32 %v151, %v998
    %v1000 = vand.u32 %v999, 4294901760
    %v1001 = vsub.f32 %v999, %v1000
    %v1002 = vand.u32 %v1001, 4294901760
    %1003 = vmatpush.msra.mxu0 %v1002
    %v1004 = vand.u32 %v150, 4294901760
    %v1005 = vsub.f32 %v150, %v1004
    %v1006 = vand.u32 %v1005, 4294901760
    %v1007 = vsub.f32 %v1005, %v1006
    %v1008 = vand.u32 %v1007, 4294901760
    %1009 = vmatpush.msra.mxu0 %v1008
    %v1010 = vand.u32 %v149, 4294901760
    %v1011 = vsub.f32 %v149, %v1010
    %v1012 = vand.u32 %v1011, 4294901760
    %v1013 = vsub.f32 %v1011, %v1012
    %v1014 = vand.u32 %v1013, 4294901760
    %1015 = vmatpush.msra.mxu0 %v1014
    %v1016 = vand.u32 %v148, 4294901760
    %v1017 = vsub.f32 %v148, %v1016
    %v1018 = vand.u32 %v1017, 4294901760
    %v1019 = vsub.f32 %v1017, %v1018
    %v1020 = vand.u32 %v1019, 4294901760
    %1021 = vmatpush.msra.mxu0 %v1020
    %v1022 = vand.u32 %v147, 4294901760
    %v1023 = vsub.f32 %v147, %v1022
    %v1024 = vand.u32 %v1023, 4294901760
    %v1025 = vsub.f32 %v1023, %v1024
    %v1026 = vand.u32 %v1025, 4294901760
    %1027 = vmatpush.msra.mxu0 %v1026
    %v1028 = vand.u32 %v146, 4294901760
    %v1029 = vsub.f32 %v146, %v1028
    %v1030 = vand.u32 %v1029, 4294901760
    %v1031 = vsub.f32 %v1029, %v1030
    %v1032 = vand.u32 %v1031, 4294901760
    %1033 = vmatpush.msra.mxu0 %v1032
    %v1034 = vand.u32 %v145, 4294901760
    %v1035 = vsub.f32 %v145, %v1034
    %v1036 = vand.u32 %v1035, 4294901760
    %v1037 = vsub.f32 %v1035, %v1036
    %v1038 = vand.u32 %v1037, 4294901760
    %1039 = vmatpush.msra.mxu0 %v1038
    %v1040 = vand.u32 %v144, 4294901760
    %v1041 = vsub.f32 %v144, %v1040
    %v1042 = vand.u32 %v1041, 4294901760
    %v1043 = vsub.f32 %v1041, %v1042
    %v1044 = vand.u32 %v1043, 4294901760
    %1045 = vmatpush.msra.mxu0 %v1044
    %v1046 = vand.u32 %v143, 4294901760
    %v1047 = vsub.f32 %v143, %v1046
    %v1048 = vand.u32 %v1047, 4294901760
    %v1049 = vsub.f32 %v1047, %v1048
    %v1050 = vand.u32 %v1049, 4294901760
    %1051 = vmatpush.msra.mxu0 %v1050
    %v1052 = vand.u32 %v109, 4294901760
    %1053 = vmatmul.f32.gmra.mxu0 %v1052
    %v1054 = vpop.f32.mrf.mxu0
    %v1055 = vadd.f32 %v946, %v1054
    %v1056 = vand.u32 %v110, 4294901760
    %1057 = vmatmul.f32.gmra.mxu0 %v1056
    %v1058 = vpop.f32.mrf.mxu0
    %v1059 = vadd.f32 %v954, %v1058
    %1060 = vdwg.mxu0
    %v1061 = vand.u32 %v158, 4294901760
    %v1062 = vsub.f32 %v158, %v1061
    %1063 = vmatpush.msra.mxu0 %v1062
    %v1064 = vand.u32 %v157, 4294901760
    %v1065 = vsub.f32 %v157, %v1064
    %1066 = vmatpush.msra.mxu0 %v1065
    %v1067 = vand.u32 %v156, 4294901760
    %v1068 = vsub.f32 %v156, %v1067
    %1069 = vmatpush.msra.mxu0 %v1068
    %v1070 = vand.u32 %v155, 4294901760
    %v1071 = vsub.f32 %v155, %v1070
    %1072 = vmatpush.msra.mxu0 %v1071
    %v1073 = vand.u32 %v154, 4294901760
    %v1074 = vsub.f32 %v154, %v1073
    %1075 = vmatpush.msra.mxu0 %v1074
    %v1076 = vand.u32 %v153, 4294901760
    %v1077 = vsub.f32 %v153, %v1076
    %1078 = vmatpush.msra.mxu0 %v1077
    %v1079 = vand.u32 %v152, 4294901760
    %v1080 = vsub.f32 %v152, %v1079
    %1081 = vmatpush.msra.mxu0 %v1080
    %v1082 = vand.u32 %v151, 4294901760
    %v1083 = vsub.f32 %v151, %v1082
    %1084 = vmatpush.msra.mxu0 %v1083
    %v1085 = vand.u32 %v150, 4294901760
    %v1086 = vsub.f32 %v150, %v1085
    %1087 = vmatpush.msra.mxu0 %v1086
    %v1088 = vand.u32 %v149, 4294901760
    %v1089 = vsub.f32 %v149, %v1088
    %1090 = vmatpush.msra.mxu0 %v1089
    %v1091 = vand.u32 %v148, 4294901760
    %v1092 = vsub.f32 %v148, %v1091
    %1093 = vmatpush.msra.mxu0 %v1092
    %v1094 = vand.u32 %v147, 4294901760
    %v1095 = vsub.f32 %v147, %v1094
    %1096 = vmatpush.msra.mxu0 %v1095
    %v1097 = vand.u32 %v146, 4294901760
    %v1098 = vsub.f32 %v146, %v1097
    %1099 = vmatpush.msra.mxu0 %v1098
    %v1100 = vand.u32 %v145, 4294901760
    %v1101 = vsub.f32 %v145, %v1100
    %1102 = vmatpush.msra.mxu0 %v1101
    %v1103 = vand.u32 %v144, 4294901760
    %v1104 = vsub.f32 %v144, %v1103
    %1105 = vmatpush.msra.mxu0 %v1104
    %v1106 = vand.u32 %v143, 4294901760
    %v1107 = vsub.f32 %v143, %v1106
    %1108 = vmatpush.msra.mxu0 %v1107
    %v1109 = vand.u32 %v109, 4294901760
    %v1110 = vsub.f32 %v109, %v1109
    %1111 = vmatmul.f32.gmra.mxu0 %v1110
    %v1112 = vpop.f32.mrf.mxu0
    %v1113 = vadd.f32 %v1055, %v1112
    %v1114 = vand.u32 %v110, 4294901760
    %v1115 = vsub.f32 %v110, %v1114
    %1116 = vmatmul.f32.gmra.mxu0 %v1115
    %v1117 = vpop.f32.mrf.mxu0
    %v1118 = vadd.f32 %v1059, %v1117
    %1119 = vdwg.mxu0
    %v1120 = vand.u32 %v158, 4294901760
    %1121 = vmatpush.msra.mxu0 %v1120
    %v1122 = vand.u32 %v157, 4294901760
    %1123 = vmatpush.msra.mxu0 %v1122
    %v1124 = vand.u32 %v156, 4294901760
    %1125 = vmatpush.msra.mxu0 %v1124
    %v1126 = vand.u32 %v155, 4294901760
    %1127 = vmatpush.msra.mxu0 %v1126
    %v1128 = vand.u32 %v154, 4294901760
    %1129 = vmatpush.msra.mxu0 %v1128
    %v1130 = vand.u32 %v153, 4294901760
    %1131 = vmatpush.msra.mxu0 %v1130
    %v1132 = vand.u32 %v152, 4294901760
    %1133 = vmatpush.msra.mxu0 %v1132
    %v1134 = vand.u32 %v151, 4294901760
    %1135 = vmatpush.msra.mxu0 %v1134
    %v1136 = vand.u32 %v150, 4294901760
    %1137 = vmatpush.msra.mxu0 %v1136
    %v1138 = vand.u32 %v149, 4294901760
    %1139 = vmatpush.msra.mxu0 %v1138
    %v1140 = vand.u32 %v148, 4294901760
    %1141 = vmatpush.msra.mxu0 %v1140
    %v1142 = vand.u32 %v147, 4294901760
    %1143 = vmatpush.msra.mxu0 %v1142
    %v1144 = vand.u32 %v146, 4294901760
    %1145 = vmatpush.msra.mxu0 %v1144
    %v1146 = vand.u32 %v145, 4294901760
    %1147 = vmatpush.msra.mxu0 %v1146
    %v1148 = vand.u32 %v144, 4294901760
    %1149 = vmatpush.msra.mxu0 %v1148
    %v1150 = vand.u32 %v143, 4294901760
    %1151 = vmatpush.msra.mxu0 %v1150
    %v1152 = vand.u32 %v109, 4294901760
    %v1153 = vsub.f32 %v109, %v1152
    %v1154 = vand.u32 %v1153, 4294901760
    %1155 = vmatmul.f32.gmra.mxu0 %v1154
    %v1156 = vpop.f32.mrf.mxu0
    %v1157 = vadd.f32 %v1113, %v1156
    %v1158 = vand.u32 %v110, 4294901760
    %v1159 = vsub.f32 %v110, %v1158
    %v1160 = vand.u32 %v1159, 4294901760
    %1161 = vmatmul.f32.gmra.mxu0 %v1160
    %v1162 = vpop.f32.mrf.mxu0
    %v1163 = vadd.f32 %v1118, %v1162
    %1164 = vdwg.mxu0
    %v1165 = vand.u32 %v158, 4294901760
    %v1166 = vsub.f32 %v158, %v1165
    %v1167 = vand.u32 %v1166, 4294901760
    %1168 = vmatpush.msra.mxu0 %v1167
    %v1169 = vand.u32 %v157, 4294901760
    %v1170 = vsub.f32 %v157, %v1169
    %v1171 = vand.u32 %v1170, 4294901760
    %1172 = vmatpush.msra.mxu0 %v1171
    %v1173 = vand.u32 %v156, 4294901760
    %v1174 = vsub.f32 %v156, %v1173
    %v1175 = vand.u32 %v1174, 4294901760
    %1176 = vmatpush.msra.mxu0 %v1175
    %v1177 = vand.u32 %v155, 4294901760
    %v1178 = vsub.f32 %v155, %v1177
    %v1179 = vand.u32 %v1178, 4294901760
    %1180 = vmatpush.msra.mxu0 %v1179
    %v1181 = vand.u32 %v154, 4294901760
    %v1182 = vsub.f32 %v154, %v1181
    %v1183 = vand.u32 %v1182, 4294901760
    %1184 = vmatpush.msra.mxu0 %v1183
    %v1185 = vand.u32 %v153, 4294901760
    %v1186 = vsub.f32 %v153, %v1185
    %v1187 = vand.u32 %v1186, 4294901760
    %1188 = vmatpush.msra.mxu0 %v1187
    %v1189 = vand.u32 %v152, 4294901760
    %v1190 = vsub.f32 %v152, %v1189
    %v1191 = vand.u32 %v1190, 4294901760
    %1192 = vmatpush.msra.mxu0 %v1191
    %v1193 = vand.u32 %v151, 4294901760
    %v1194 = vsub.f32 %v151, %v1193
    %v1195 = vand.u32 %v1194, 4294901760
    %1196 = vmatpush.msra.mxu0 %v1195
    %v1197 = vand.u32 %v150, 4294901760
    %v1198 = vsub.f32 %v150, %v1197
    %v1199 = vand.u32 %v1198, 4294901760
    %1200 = vmatpush.msra.mxu0 %v1199
    %v1201 = vand.u32 %v149, 4294901760
    %v1202 = vsub.f32 %v149, %v1201
    %v1203 = vand.u32 %v1202, 4294901760
    %1204 = vmatpush.msra.mxu0 %v1203
    %v1205 = vand.u32 %v148, 4294901760
    %v1206 = vsub.f32 %v148, %v1205
    %v1207 = vand.u32 %v1206, 4294901760
    %1208 = vmatpush.msra.mxu0 %v1207
    %v1209 = vand.u32 %v147, 4294901760
    %v1210 = vsub.f32 %v147, %v1209
    %v1211 = vand.u32 %v1210, 4294901760
    %1212 = vmatpush.msra.mxu0 %v1211
    %v1213 = vand.u32 %v146, 4294901760
    %v1214 = vsub.f32 %v146, %v1213
    %v1215 = vand.u32 %v1214, 4294901760
    %1216 = vmatpush.msra.mxu0 %v1215
    %v1217 = vand.u32 %v145, 4294901760
    %v1218 = vsub.f32 %v145, %v1217
    %v1219 = vand.u32 %v1218, 4294901760
    %1220 = vmatpush.msra.mxu0 %v1219
    %v1221 = vand.u32 %v144, 4294901760
    %v1222 = vsub.f32 %v144, %v1221
    %v1223 = vand.u32 %v1222, 4294901760
    %1224 = vmatpush.msra.mxu0 %v1223
    %v1225 = vand.u32 %v143, 4294901760
    %v1226 = vsub.f32 %v143, %v1225
    %v1227 = vand.u32 %v1226, 4294901760
    %1228 = vmatpush.msra.mxu0 %v1227
    %v1229 = vand.u32 %v109, 4294901760
    %1230 = vmatmul.f32.gmra.mxu0 %v1229
    %v1231 = vpop.f32.mrf.mxu0
    %v1232 = vadd.f32 %v1157, %v1231
    %v1233 = vand.u32 %v110, 4294901760
    %1234 = vmatmul.f32.gmra.mxu0 %v1233
    %v1235 = vpop.f32.mrf.mxu0
    %v1236 = vadd.f32 %v1163, %v1235
    %1237 = vdwg.mxu0
    %v1238 = vand.u32 %v158, 4294901760
    %1239 = vmatpush.msra.mxu0 %v1238
    %v1240 = vand.u32 %v157, 4294901760
    %1241 = vmatpush.msra.mxu0 %v1240
    %v1242 = vand.u32 %v156, 4294901760
    %1243 = vmatpush.msra.mxu0 %v1242
    %v1244 = vand.u32 %v155, 4294901760
    %1245 = vmatpush.msra.mxu0 %v1244
    %v1246 = vand.u32 %v154, 4294901760
    %1247 = vmatpush.msra.mxu0 %v1246
    %v1248 = vand.u32 %v153, 4294901760
    %1249 = vmatpush.msra.mxu0 %v1248
    %v1250 = vand.u32 %v152, 4294901760
    %1251 = vmatpush.msra.mxu0 %v1250
    %v1252 = vand.u32 %v151, 4294901760
    %1253 = vmatpush.msra.mxu0 %v1252
    %v1254 = vand.u32 %v150, 4294901760
    %1255 = vmatpush.msra.mxu0 %v1254
    %v1256 = vand.u32 %v149, 4294901760
    %1257 = vmatpush.msra.mxu0 %v1256
    %v1258 = vand.u32 %v148, 4294901760
    %1259 = vmatpush.msra.mxu0 %v1258
    %v1260 = vand.u32 %v147, 4294901760
    %1261 = vmatpush.msra.mxu0 %v1260
    %v1262 = vand.u32 %v146, 4294901760
    %1263 = vmatpush.msra.mxu0 %v1262
    %v1264 = vand.u32 %v145, 4294901760
    %1265 = vmatpush.msra.mxu0 %v1264
    %v1266 = vand.u32 %v144, 4294901760
    %1267 = vmatpush.msra.mxu0 %v1266
    %v1268 = vand.u32 %v143, 4294901760
    %1269 = vmatpush.msra.mxu0 %v1268
    %v1270 = vand.u32 %v109, 4294901760
    %1271 = vmatmul.f32.gmra.mxu0 %v1270
    %v1272 = vpop.f32.mrf.mxu0
    %v1273 = vadd.f32 %v1232, %v1272
    %v1274 = vand.u32 %v110, 4294901760
    %1275 = vmatmul.f32.gmra.mxu0 %v1274
    %v1276 = vpop.f32.mrf.mxu0
    %v1277 = vadd.f32 %v1236, %v1276
    %1278 = vdwg.mxu0
    %1279 = vadd.xlane.f32.xlu0 %v1273
    %v1280 = vpop.xlane.xlu0 %1279
    %1281 = vadd.xlane.f32.xlu0 %v1277
    %v1282 = vpop.xlane.xlu0 %1281
    %v1283 = vmul.f32 %v1280, 0.03125
    %v1284 = vmul.f32 %v1282, 0.03125
    %v1285 = vsub.f32 %v1273, %v1283
    %v1286 = vsub.f32 %v1277, %v1284
    %v1287 = vmul.f32 %v1285, %v92
    %v1288 = vmul.f32 %v1286, %v92
    %v1289 = vmul.f32 %v1287, %v1287
    %v1290 = vmul.f32 %v1288, %v1288
    %1291 = vadd.xlane.f32.xlu0 %v1289
    %v1292 = vpop.xlane.xlu0 %1291
    %1293 = vadd.xlane.f32.xlu0 %v1290
    %v1294 = vpop.xlane.xlu0 %1293
    %v1295 = vmul.f32 %v1292, 0.03125
    %v1296 = vmul.f32 %v1294, 0.03125
    %v1297 = vadd.f32 %v1295, 1e-05
    %v1298 = vadd.f32 %v1296, 1e-05
    %v1299 = vrsqrt.pop %v1297
    %v1300 = vmul.f32 %v1299, %v1297
    %v1301 = vmul.f32 %v1300, %v1299
    %v1302 = vmul.f32 0.5, %v1301
    %v1303 = vsub.f32 1.5, %v1302
    %v1304 = vmul.f32 %v1299, %v1303
    %vm1305 = vweird.f32 %v1297
    %vm1306 = vweird.f32 %v1299
    %vm1307 = vmor %vm1305, %vm1306
    %v1308 = vsel %vm1307, %v1299, %v1304
    %v1309 = vrsqrt.pop %v1298
    %v1310 = vmul.f32 %v1309, %v1298
    %v1311 = vmul.f32 %v1310, %v1309
    %v1312 = vmul.f32 0.5, %v1311
    %v1313 = vsub.f32 1.5, %v1312
    %v1314 = vmul.f32 %v1309, %v1313
    %vm1315 = vweird.f32 %v1298
    %vm1316 = vweird.f32 %v1309
    %vm1317 = vmor %vm1315, %vm1316
    %v1318 = vsel %vm1317, %v1309, %v1314
    %v1319 = vmul.f32 %v1285, %v1308
    %v1320 = vmul.f32 %v1286, %v1318
    %v1321 = vld [vmem:[%s3] sm:$0x1]
    %v1323 = vperm.slane %v1321, 0
    %v1325 = vmul.f32 %v1319, %v1323
    %v1326 = vmul.f32 %v1320, %v1323
    %v1327 = vld [vmem:[%s4] sm:$0x1]
    %v1329 = vperm.slane %v1327, 0
    %v1331 = vadd.f32 %v1325, %v1329
    %v1332 = vadd.f32 %v1326, %v1329
    %v1333 = vmax.f32 %v1331, 0.0
    %v1334 = vmax.f32 %v1332, 0.0
    %v1337 = vrot.slane %v1333, 7
    %v1338 = vrot.slane %v1334, 7
    %v1341 = vsel %vm101, 0.0, %v1337
    %v1342 = vsel %vm101, 0.0, %v1338
    %v1343 = vrot.slane %v1333, 1
    %v1344 = vrot.slane %v1334, 1
    %v1347 = vsel %vm108, %v1343, 0.0
    %v1348 = vsel %vm108, %v1344, 0.0
    %v1349 = vld [vmem:[#allocation8] sm:$0xff]
    %v1350 = vld [vmem:[#allocation8 + $0x8] sm:$0xff]
    %v1351 = vld [vmem:[#allocation8 + $0x10] sm:$0xff]
    %v1352 = vld [vmem:[#allocation8 + $0x18] sm:$0xff]
    %v1353 = vld [vmem:[#allocation8 + $0x20] sm:$0xff]
    %v1354 = vld [vmem:[#allocation8 + $0x28] sm:$0xff]
    %v1355 = vld [vmem:[#allocation8 + $0x30] sm:$0xff]
    %v1356 = vld [vmem:[#allocation8 + $0x38] sm:$0xff]
    %v1357 = vld [vmem:[#allocation8 + $0x40] sm:$0xff]
    %v1358 = vld [vmem:[#allocation8 + $0x48] sm:$0xff]
    %v1359 = vld [vmem:[#allocation8 + $0x50] sm:$0xff]
    %v1360 = vld [vmem:[#allocation8 + $0x58] sm:$0xff]
    %v1361 = vld [vmem:[#allocation8 + $0x60] sm:$0xff]
    %v1362 = vld [vmem:[#allocation8 + $0x68] sm:$0xff]
    %v1363 = vld [vmem:[#allocation8 + $0x70] sm:$0xff]
    %v1364 = vld [vmem:[#allocation8 + $0x78] sm:$0xff]
    %v1365 = vld [vmem:[#allocation8 + $0x80] sm:$0xff]
    %v1366 = vld [vmem:[#allocation8 + $0x88] sm:$0xff]
    %v1367 = vld [vmem:[#allocation8 + $0x90] sm:$0xff]
    %v1368 = vld [vmem:[#allocation8 + $0x98] sm:$0xff]
    %v1369 = vld [vmem:[#allocation8 + $0xa0] sm:$0xff]
    %v1370 = vld [vmem:[#allocation8 + $0xa8] sm:$0xff]
    %v1371 = vld [vmem:[#allocation8 + $0xb0] sm:$0xff]
    %v1372 = vld [vmem:[#allocation8 + $0xb8] sm:$0xff]
    %v1373 = vld [vmem:[#allocation8 + $0xc0] sm:$0xff]
    %v1374 = vld [vmem:[#allocation8 + $0xc8] sm:$0xff]
    %v1375 = vld [vmem:[#allocation8 + $0xd0] sm:$0xff]
    %v1376 = vld [vmem:[#allocation8 + $0xd8] sm:$0xff]
    %v1377 = vld [vmem:[#allocation8 + $0xe0] sm:$0xff]
    %v1378 = vld [vmem:[#allocation8 + $0xe8] sm:$0xff]
    %v1379 = vld [vmem:[#allocation8 + $0xf0] sm:$0xff]
    %v1380 = vld [vmem:[#allocation8 + $0xf8] sm:$0xff]
    %v1381 = vld [vmem:[#allocation8 + $0x100] sm:$0xff]
    %v1382 = vld [vmem:[#allocation8 + $0x108] sm:$0xff]
    %v1383 = vld [vmem:[#allocation8 + $0x110] sm:$0xff]
    %v1384 = vld [vmem:[#allocation8 + $0x118] sm:$0xff]
    %v1385 = vld [vmem:[#allocation8 + $0x120] sm:$0xff]
    %v1386 = vld [vmem:[#allocation8 + $0x128] sm:$0xff]
    %v1387 = vld [vmem:[#allocation8 + $0x130] sm:$0xff]
    %v1388 = vld [vmem:[#allocation8 + $0x138] sm:$0xff]
    %v1389 = vld [vmem:[#allocation8 + $0x140] sm:$0xff]
    %v1390 = vld [vmem:[#allocation8 + $0x148] sm:$0xff]
    %v1391 = vld [vmem:[#allocation8 + $0x150] sm:$0xff]
    %v1392 = vld [vmem:[#allocation8 + $0x158] sm:$0xff]
    %v1393 = vld [vmem:[#allocation8 + $0x160] sm:$0xff]
    %v1394 = vld [vmem:[#allocation8 + $0x168] sm:$0xff]
    %v1395 = vld [vmem:[#allocation8 + $0x170] sm:$0xff]
    %v1396 = vld [vmem:[#allocation8 + $0x178] sm:$0xff]
    %v1397 = vld [vmem:[%s6] sm:$0x1]
    %v1399 = vperm.slane %v1397, 0
    %v1401 = vand.u32 %v1364, 4294901760
    %1402 = vmatpush.msra.mxu0 %v1401
    %v1403 = vand.u32 %v1363, 4294901760
    %1404 = vmatpush.msra.mxu0 %v1403
    %v1405 = vand.u32 %v1362, 4294901760
    %1406 = vmatpush.msra.mxu0 %v1405
    %v1407 = vand.u32 %v1361, 4294901760
    %1408 = vmatpush.msra.mxu0 %v1407
    %v1409 = vand.u32 %v1360, 4294901760
    %1410 = vmatpush.msra.mxu0 %v1409
    %v1411 = vand.u32 %v1359, 4294901760
    %1412 = vmatpush.msra.mxu0 %v1411
    %v1413 = vand.u32 %v1358, 4294901760
    %1414 = vmatpush.msra.mxu0 %v1413
    %v1415 = vand.u32 %v1357, 4294901760
    %1416 = vmatpush.msra.mxu0 %v1415
    %v1417 = vand.u32 %v1356, 4294901760
    %1418 = vmatpush.msra.mxu0 %v1417
    %v1419 = vand.u32 %v1355, 4294901760
    %1420 = vmatpush.msra.mxu0 %v1419
    %v1421 = vand.u32 %v1354, 4294901760
    %1422 = vmatpush.msra.mxu0 %v1421
    %v1423 = vand.u32 %v1353, 4294901760
    %1424 = vmatpush.msra.mxu0 %v1423
    %v1425 = vand.u32 %v1352, 4294901760
    %1426 = vmatpush.msra.mxu0 %v1425
    %v1427 = vand.u32 %v1351, 4294901760
    %1428 = vmatpush.msra.mxu0 %v1427
    %v1429 = vand.u32 %v1350, 4294901760
    %1430 = vmatpush.msra.mxu0 %v1429
    %v1431 = vand.u32 %v1349, 4294901760
    %1432 = vmatpush.msra.mxu0 %v1431
    %v1433 = vand.u32 %v1341, 4294901760
    %v1434 = vsub.f32 %v1341, %v1433
    %v1435 = vand.u32 %v1434, 4294901760
    %v1436 = vsub.f32 %v1434, %v1435
    %v1437 = vand.u32 %v1436, 4294901760
    %1438 = vmatmul.f32.gmra.mxu0 %v1437
    %v1439 = vpop.f32.mrf.mxu0
    %v1440 = vadd.f32 %v1399, %v1439
    %v1441 = vand.u32 %v1342, 4294901760
    %v1442 = vsub.f32 %v1342, %v1441
    %v1443 = vand.u32 %v1442, 4294901760
    %v1444 = vsub.f32 %v1442, %v1443
    %v1445 = vand.u32 %v1444, 4294901760
    %1446 = vmatmul.f32.gmra.mxu0 %v1445
    %v1447 = vpop.f32.mrf.mxu0
    %v1448 = vadd.f32 %v1399, %v1447
    %1449 = vdwg.mxu0
    %v1450 = vand.u32 %v1364, 4294901760
    %v1451 = vsub.f32 %v1364, %v1450
    %v1452 = vand.u32 %v1451, 4294901760
    %v1453 = vsub.f32 %v1451, %v1452
    %v1454 = vand.u32 %v1453, 4294901760
    %1455 = vmatpush.msra.mxu0 %v1454
    %v1456 = vand.u32 %v1363, 4294901760
    %v1457 = vsub.f32 %v1363, %v1456
    %v1458 = vand.u32 %v1457, 4294901760
    %v1459 = vsub.f32 %v1457, %v1458
    %v1460 = vand.u32 %v1459, 4294901760
    %1461 = vmatpush.msra.mxu0 %v1460
    %v1462 = vand.u32 %v1362, 4294901760
    %v1463 = vsub.f32 %v1362, %v1462
    %v1464 = vand.u32 %v1463, 4294901760
    %v1465 = vsub.f32 %v1463, %v1464
    %v1466 = vand.u32 %v1465, 4294901760
    %1467 = vmatpush.msra.mxu0 %v1466
    %v1468 = vand.u32 %v1361, 4294901760
    %v1469 = vsub.f32 %v1361, %v1468
    %v1470 = vand.u32 %v1469, 4294901760
    %v1471 = vsub.f32 %v1469, %v1470
    %v1472 = vand.u32 %v1471, 4294901760
    %1473 = vmatpush.msra.mxu0 %v1472
    %v1474 = vand.u32 %v1360, 4294901760
    %v1475 = vsub.f32 %v1360, %v1474
    %v1476 = vand.u32 %v1475, 4294901760
    %v1477 = vsub.f32 %v1475, %v1476
    %v1478 = vand.u32 %v1477, 4294901760
    %1479 = vmatpush.msra.mxu0 %v1478
    %v1480 = vand.u32 %v1359, 4294901760
    %v1481 = vsub.f32 %v1359, %v1480
    %v1482 = vand.u32 %v1481, 4294901760
    %v1483 = vsub.f32 %v1481, %v1482
    %v1484 = vand.u32 %v1483, 4294901760
    %1485 = vmatpush.msra.mxu0 %v1484
    %v1486 = vand.u32 %v1358, 4294901760
    %v1487 = vsub.f32 %v1358, %v1486
    %v1488 = vand.u32 %v1487, 4294901760
    %v1489 = vsub.f32 %v1487, %v1488
    %v1490 = vand.u32 %v1489, 4294901760
    %1491 = vmatpush.msra.mxu0 %v1490
    %v1492 = vand.u32 %v1357, 4294901760
    %v1493 = vsub.f32 %v1357, %v1492
    %v1494 = vand.u32 %v1493, 4294901760
    %v1495 = vsub.f32 %v1493, %v1494
    %v1496 = vand.u32 %v1495, 4294901760
    %1497 = vmatpush.msra.mxu0 %v1496
    %v1498 = vand.u32 %v1356, 4294901760
    %v1499 = vsub.f32 %v1356, %v1498
    %v1500 = vand.u32 %v1499, 4294901760
    %v1501 = vsub.f32 %v1499, %v1500
    %v1502 = vand.u32 %v1501, 4294901760
    %1503 = vmatpush.msra.mxu0 %v1502
    %v1504 = vand.u32 %v1355, 4294901760
    %v1505 = vsub.f32 %v1355, %v1504
    %v1506 = vand.u32 %v1505, 4294901760
    %v1507 = vsub.f32 %v1505, %v1506
    %v1508 = vand.u32 %v1507, 4294901760
    %1509 = vmatpush.msra.mxu0 %v1508
    %v1510 = vand.u32 %v1354, 4294901760
    %v1511 = vsub.f32 %v1354, %v1510
    %v1512 = vand.u32 %v1511, 4294901760
    %v1513 = vsub.f32 %v1511, %v1512
    %v1514 = vand.u32 %v1513, 4294901760
    %1515 = vmatpush.msra.mxu0 %v1514
    %v1516 = vand.u32 %v1353, 4294901760
    %v1517 = vsub.f32 %v1353, %v1516
    %v1518 = vand.u32 %v1517, 4294901760
    %v1519 = vsub.f32 %v1517, %v1518
    %v1520 = vand.u32 %v1519, 4294901760
    %1521 = vmatpush.msra.mxu0 %v1520
    %v1522 = vand.u32 %v1352, 4294901760
    %v1523 = vsub.f32 %v1352, %v1522
    %v1524 = vand.u32 %v1523, 4294901760
    %v1525 = vsub.f32 %v1523, %v1524
    %v1526 = vand.u32 %v1525, 4294901760
    %1527 = vmatpush.msra.mxu0 %v1526
    %v1528 = vand.u32 %v1351, 4294901760
    %v1529 = vsub.f32 %v1351, %v1528
    %v1530 = vand.u32 %v1529, 4294901760
    %v1531 = vsub.f32 %v1529, %v1530
    %v1532 = vand.u32 %v1531, 4294901760
    %1533 = vmatpush.msra.mxu0 %v1532
    %v1534 = vand.u32 %v1350, 4294901760
    %v1535 = vsub.f32 %v1350, %v1534
    %v1536 = vand.u32 %v1535, 4294901760
    %v1537 = vsub.f32 %v1535, %v1536
    %v1538 = vand.u32 %v1537, 4294901760
    %1539 = vmatpush.msra.mxu0 %v1538
    %v1540 = vand.u32 %v1349, 4294901760
    %v1541 = vsub.f32 %v1349, %v1540
    %v1542 = vand.u32 %v1541, 4294901760
    %v1543 = vsub.f32 %v1541, %v1542
    %v1544 = vand.u32 %v1543, 4294901760
    %1545 = vmatpush.msra.mxu0 %v1544
    %v1546 = vand.u32 %v1341, 4294901760
    %1547 = vmatmul.f32.gmra.mxu0 %v1546
    %v1548 = vpop.f32.mrf.mxu0
    %v1549 = vadd.f32 %v1440, %v1548
    %v1550 = vand.u32 %v1342, 4294901760
    %1551 = vmatmul.f32.gmra.mxu0 %v1550
    %v1552 = vpop.f32.mrf.mxu0
    %v1553 = vadd.f32 %v1448, %v1552
    %1554 = vdwg.mxu0
    %v1555 = vand.u32 %v1364, 4294901760
    %v1556 = vsub.f32 %v1364, %v1555
    %1557 = vmatpush.msra.mxu0 %v1556
    %v1558 = vand.u32 %v1363, 4294901760
    %v1559 = vsub.f32 %v1363, %v1558
    %1560 = vmatpush.msra.mxu0 %v1559
    %v1561 = vand.u32 %v1362, 4294901760
    %v1562 = vsub.f32 %v1362, %v1561
    %1563 = vmatpush.msra.mxu0 %v1562
    %v1564 = vand.u32 %v1361, 4294901760
    %v1565 = vsub.f32 %v1361, %v1564
    %1566 = vmatpush.msra.mxu0 %v1565
    %v1567 = vand.u32 %v1360, 4294901760
    %v1568 = vsub.f32 %v1360, %v1567
    %1569 = vmatpush.msra.mxu0 %v1568
    %v1570 = vand.u32 %v1359, 4294901760
    %v1571 = vsub.f32 %v1359, %v1570
    %1572 = vmatpush.msra.mxu0 %v1571
    %v1573 = vand.u32 %v1358, 4294901760
    %v1574 = vsub.f32 %v1358, %v1573
    %1575 = vmatpush.msra.mxu0 %v1574
    %v1576 = vand.u32 %v1357, 4294901760
    %v1577 = vsub.f32 %v1357, %v1576
    %1578 = vmatpush.msra.mxu0 %v1577
    %v1579 = vand.u32 %v1356, 4294901760
    %v1580 = vsub.f32 %v1356, %v1579
    %1581 = vmatpush.msra.mxu0 %v1580
    %v1582 = vand.u32 %v1355, 4294901760
    %v1583 = vsub.f32 %v1355, %v1582
    %1584 = vmatpush.msra.mxu0 %v1583
    %v1585 = vand.u32 %v1354, 4294901760
    %v1586 = vsub.f32 %v1354, %v1585
    %1587 = vmatpush.msra.mxu0 %v1586
    %v1588 = vand.u32 %v1353, 4294901760
    %v1589 = vsub.f32 %v1353, %v1588
    %1590 = vmatpush.msra.mxu0 %v1589
    %v1591 = vand.u32 %v1352, 4294901760
    %v1592 = vsub.f32 %v1352, %v1591
    %1593 = vmatpush.msra.mxu0 %v1592
    %v1594 = vand.u32 %v1351, 4294901760
    %v1595 = vsub.f32 %v1351, %v1594
    %1596 = vmatpush.msra.mxu0 %v1595
    %v1597 = vand.u32 %v1350, 4294901760
    %v1598 = vsub.f32 %v1350, %v1597
    %1599 = vmatpush.msra.mxu0 %v1598
    %v1600 = vand.u32 %v1349, 4294901760
    %v1601 = vsub.f32 %v1349, %v1600
    %1602 = vmatpush.msra.mxu0 %v1601
    %v1603 = vand.u32 %v1341, 4294901760
    %v1604 = vsub.f32 %v1341, %v1603
    %1605 = vmatmul.f32.gmra.mxu0 %v1604
    %v1606 = vpop.f32.mrf.mxu0
    %v1607 = vadd.f32 %v1549, %v1606
    %v1608 = vand.u32 %v1342, 4294901760
    %v1609 = vsub.f32 %v1342, %v1608
    %1610 = vmatmul.f32.gmra.mxu0 %v1609
    %v1611 = vpop.f32.mrf.mxu0
    %v1612 = vadd.f32 %v1553, %v1611
    %1613 = vdwg.mxu0
    %v1614 = vand.u32 %v1364, 4294901760
    %1615 = vmatpush.msra.mxu0 %v1614
    %v1616 = vand.u32 %v1363, 4294901760
    %1617 = vmatpush.msra.mxu0 %v1616
    %v1618 = vand.u32 %v1362, 4294901760
    %1619 = vmatpush.msra.mxu0 %v1618
    %v1620 = vand.u32 %v1361, 4294901760
    %1621 = vmatpush.msra.mxu0 %v1620
    %v1622 = vand.u32 %v1360, 4294901760
    %1623 = vmatpush.msra.mxu0 %v1622
    %v1624 = vand.u32 %v1359, 4294901760
    %1625 = vmatpush.msra.mxu0 %v1624
    %v1626 = vand.u32 %v1358, 4294901760
    %1627 = vmatpush.msra.mxu0 %v1626
    %v1628 = vand.u32 %v1357, 4294901760
    %1629 = vmatpush.msra.mxu0 %v1628
    %v1630 = vand.u32 %v1356, 4294901760
    %1631 = vmatpush.msra.mxu0 %v1630
    %v1632 = vand.u32 %v1355, 4294901760
    %1633 = vmatpush.msra.mxu0 %v1632
    %v1634 = vand.u32 %v1354, 4294901760
    %1635 = vmatpush.msra.mxu0 %v1634
    %v1636 = vand.u32 %v1353, 4294901760
    %1637 = vmatpush.msra.mxu0 %v1636
    %v1638 = vand.u32 %v1352, 4294901760
    %1639 = vmatpush.msra.mxu0 %v1638
    %v1640 = vand.u32 %v1351, 4294901760
    %1641 = vmatpush.msra.mxu0 %v1640
    %v1642 = vand.u32 %v1350, 4294901760
    %1643 = vmatpush.msra.mxu0 %v1642
    %v1644 = vand.u32 %v1349, 4294901760
    %1645 = vmatpush.msra.mxu0 %v1644
    %v1646 = vand.u32 %v1341, 4294901760
    %v1647 = vsub.f32 %v1341, %v1646
    %v1648 = vand.u32 %v1647, 4294901760
    %1649 = vmatmul.f32.gmra.mxu0 %v1648
    %v1650 = vpop.f32.mrf.mxu0
    %v1651 = vadd.f32 %v1607, %v1650
    %v1652 = vand.u32 %v1342, 4294901760
    %v1653 = vsub.f32 %v1342, %v1652
    %v1654 = vand.u32 %v1653, 4294901760
    %1655 = vmatmul.f32.gmra.mxu0 %v1654
    %v1656 = vpop.f32.mrf.mxu0
    %v1657 = vadd.f32 %v1612, %v1656
    %1658 = vdwg.mxu0
    %v1659 = vand.u32 %v1364, 4294901760
    %v1660 = vsub.f32 %v1364, %v1659
    %v1661 = vand.u32 %v1660, 4294901760
    %1662 = vmatpush.msra.mxu0 %v1661
    %v1663 = vand.u32 %v1363, 4294901760
    %v1664 = vsub.f32 %v1363, %v1663
    %v1665 = vand.u32 %v1664, 4294901760
    %1666 = vmatpush.msra.mxu0 %v1665
    %v1667 = vand.u32 %v1362, 4294901760
    %v1668 = vsub.f32 %v1362, %v1667
    %v1669 = vand.u32 %v1668, 4294901760
    %1670 = vmatpush.msra.mxu0 %v1669
    %v1671 = vand.u32 %v1361, 4294901760
    %v1672 = vsub.f32 %v1361, %v1671
    %v1673 = vand.u32 %v1672, 4294901760
    %1674 = vmatpush.msra.mxu0 %v1673
    %v1675 = vand.u32 %v1360, 4294901760
    %v1676 = vsub.f32 %v1360, %v1675
    %v1677 = vand.u32 %v1676, 4294901760
    %1678 = vmatpush.msra.mxu0 %v1677
    %v1679 = vand.u32 %v1359, 4294901760
    %v1680 = vsub.f32 %v1359, %v1679
    %v1681 = vand.u32 %v1680, 4294901760
    %1682 = vmatpush.msra.mxu0 %v1681
    %v1683 = vand.u32 %v1358, 4294901760
    %v1684 = vsub.f32 %v1358, %v1683
    %v1685 = vand.u32 %v1684, 4294901760
    %1686 = vmatpush.msra.mxu0 %v1685
    %v1687 = vand.u32 %v1357, 4294901760
    %v1688 = vsub.f32 %v1357, %v1687
    %v1689 = vand.u32 %v1688, 4294901760
    %1690 = vmatpush.msra.mxu0 %v1689
    %v1691 = vand.u32 %v1356, 4294901760
    %v1692 = vsub.f32 %v1356, %v1691
    %v1693 = vand.u32 %v1692, 4294901760
    %1694 = vmatpush.msra.mxu0 %v1693
    %v1695 = vand.u32 %v1355, 4294901760
    %v1696 = vsub.f32 %v1355, %v1695
    %v1697 = vand.u32 %v1696, 4294901760
    %1698 = vmatpush.msra.mxu0 %v1697
    %v1699 = vand.u32 %v1354, 4294901760
    %v1700 = vsub.f32 %v1354, %v1699
    %v1701 = vand.u32 %v1700, 4294901760
    %1702 = vmatpush.msra.mxu0 %v1701
    %v1703 = vand.u32 %v1353, 4294901760
    %v1704 = vsub.f32 %v1353, %v1703
    %v1705 = vand.u32 %v1704, 4294901760
    %1706 = vmatpush.msra.mxu0 %v1705
    %v1707 = vand.u32 %v1352, 4294901760
    %v1708 = vsub.f32 %v1352, %v1707
    %v1709 = vand.u32 %v1708, 4294901760
    %1710 = vmatpush.msra.mxu0 %v1709
    %v1711 = vand.u32 %v1351, 4294901760
    %v1712 = vsub.f32 %v1351, %v1711
    %v1713 = vand.u32 %v1712, 4294901760
    %1714 = vmatpush.msra.mxu0 %v1713
    %v1715 = vand.u32 %v1350, 4294901760
    %v1716 = vsub.f32 %v1350, %v1715
    %v1717 = vand.u32 %v1716, 4294901760
    %1718 = vmatpush.msra.mxu0 %v1717
    %v1719 = vand.u32 %v1349, 4294901760
    %v1720 = vsub.f32 %v1349, %v1719
    %v1721 = vand.u32 %v1720, 4294901760
    %1722 = vmatpush.msra.mxu0 %v1721
    %v1723 = vand.u32 %v1341, 4294901760
    %1724 = vmatmul.f32.gmra.mxu0 %v1723
    %v1725 = vpop.f32.mrf.mxu0
    %v1726 = vadd.f32 %v1651, %v1725
    %v1727 = vand.u32 %v1342, 4294901760
    %1728 = vmatmul.f32.gmra.mxu0 %v1727
    %v1729 = vpop.f32.mrf.mxu0
    %v1730 = vadd.f32 %v1657, %v1729
    %1731 = vdwg.mxu0
    %v1732 = vand.u32 %v1364, 4294901760
    %1733 = vmatpush.msra.mxu0 %v1732
    %v1734 = vand.u32 %v1363, 4294901760
    %1735 = vmatpush.msra.mxu0 %v1734
    %v1736 = vand.u32 %v1362, 4294901760
    %1737 = vmatpush.msra.mxu0 %v1736
    %v1738 = vand.u32 %v1361, 4294901760
    %1739 = vmatpush.msra.mxu0 %v1738
    %v1740 = vand.u32 %v1360, 4294901760
    %1741 = vmatpush.msra.mxu0 %v1740
    %v1742 = vand.u32 %v1359, 4294901760
    %1743 = vmatpush.msra.mxu0 %v1742
    %v1744 = vand.u32 %v1358, 4294901760
    %1745 = vmatpush.msra.mxu0 %v1744
    %v1746 = vand.u32 %v1357, 4294901760
    %1747 = vmatpush.msra.mxu0 %v1746
    %v1748 = vand.u32 %v1356, 4294901760
    %1749 = vmatpush.msra.mxu0 %v1748
    %v1750 = vand.u32 %v1355, 4294901760
    %1751 = vmatpush.msra.mxu0 %v1750
    %v1752 = vand.u32 %v1354, 4294901760
    %1753 = vmatpush.msra.mxu0 %v1752
    %v1754 = vand.u32 %v1353, 4294901760
    %1755 = vmatpush.msra.mxu0 %v1754
    %v1756 = vand.u32 %v1352, 4294901760
    %1757 = vmatpush.msra.mxu0 %v1756
    %v1758 = vand.u32 %v1351, 4294901760
    %1759 = vmatpush.msra.mxu0 %v1758
    %v1760 = vand.u32 %v1350, 4294901760
    %1761 = vmatpush.msra.mxu0 %v1760
    %v1762 = vand.u32 %v1349, 4294901760
    %1763 = vmatpush.msra.mxu0 %v1762
    %v1764 = vand.u32 %v1341, 4294901760
    %1765 = vmatmul.f32.gmra.mxu0 %v1764
    %v1766 = vpop.f32.mrf.mxu0
    %v1767 = vadd.f32 %v1726, %v1766
    %v1768 = vand.u32 %v1342, 4294901760
    %1769 = vmatmul.f32.gmra.mxu0 %v1768
    %v1770 = vpop.f32.mrf.mxu0
    %v1771 = vadd.f32 %v1730, %v1770
    %1772 = vdwg.mxu0
    %v1773 = vand.u32 %v1380, 4294901760
    %1774 = vmatpush.msra.mxu0 %v1773
    %v1775 = vand.u32 %v1379, 4294901760
    %1776 = vmatpush.msra.mxu0 %v1775
    %v1777 = vand.u32 %v1378, 4294901760
    %1778 = vmatpush.msra.mxu0 %v1777
    %v1779 = vand.u32 %v1377, 4294901760
    %1780 = vmatpush.msra.mxu0 %v1779
    %v1781 = vand.u32 %v1376, 4294901760
    %1782 = vmatpush.msra.mxu0 %v1781
    %v1783 = vand.u32 %v1375, 4294901760
    %1784 = vmatpush.msra.mxu0 %v1783
    %v1785 = vand.u32 %v1374, 4294901760
    %1786 = vmatpush.msra.mxu0 %v1785
    %v1787 = vand.u32 %v1373, 4294901760
    %1788 = vmatpush.msra.mxu0 %v1787
    %v1789 = vand.u32 %v1372, 4294901760
    %1790 = vmatpush.msra.mxu0 %v1789
    %v1791 = vand.u32 %v1371, 4294901760
    %1792 = vmatpush.msra.mxu0 %v1791
    %v1793 = vand.u32 %v1370, 4294901760
    %1794 = vmatpush.msra.mxu0 %v1793
    %v1795 = vand.u32 %v1369, 4294901760
    %1796 = vmatpush.msra.mxu0 %v1795
    %v1797 = vand.u32 %v1368, 4294901760
    %1798 = vmatpush.msra.mxu0 %v1797
    %v1799 = vand.u32 %v1367, 4294901760
    %1800 = vmatpush.msra.mxu0 %v1799
    %v1801 = vand.u32 %v1366, 4294901760
    %1802 = vmatpush.msra.mxu0 %v1801
    %v1803 = vand.u32 %v1365, 4294901760
    %1804 = vmatpush.msra.mxu0 %v1803
    %v1805 = vand.u32 %v1333, 4294901760
    %v1806 = vsub.f32 %v1333, %v1805
    %v1807 = vand.u32 %v1806, 4294901760
    %v1808 = vsub.f32 %v1806, %v1807
    %v1809 = vand.u32 %v1808, 4294901760
    %1810 = vmatmul.f32.gmra.mxu0 %v1809
    %v1811 = vpop.f32.mrf.mxu0
    %v1812 = vadd.f32 %v1767, %v1811
    %v1813 = vand.u32 %v1334, 4294901760
    %v1814 = vsub.f32 %v1334, %v1813
    %v1815 = vand.u32 %v1814, 4294901760
    %v1816 = vsub.f32 %v1814, %v1815
    %v1817 = vand.u32 %v1816, 4294901760
    %1818 = vmatmul.f32.gmra.mxu0 %v1817
    %v1819 = vpop.f32.mrf.mxu0
    %v1820 = vadd.f32 %v1771, %v1819
    %1821 = vdwg.mxu0
    %v1822 = vand.u32 %v1380, 4294901760
    %v1823 = vsub.f32 %v1380, %v1822
    %v1824 = vand.u32 %v1823, 4294901760
    %v1825 = vsub.f32 %v1823, %v1824
    %v1826 = vand.u32 %v1825, 4294901760
    %1827 = vmatpush.msra.mxu0 %v1826
    %v1828 = vand.u32 %v1379, 4294901760
    %v1829 = vsub.f32 %v1379, %v1828
    %v1830 = vand.u32 %v1829, 4294901760
    %v1831 = vsub.f32 %v1829, %v1830
    %v1832 = vand.u32 %v1831, 4294901760
    %1833 = vmatpush.msra.mxu0 %v1832
    %v1834 = vand.u32 %v1378, 4294901760
    %v1835 = vsub.f32 %v1378, %v1834
    %v1836 = vand.u32 %v1835, 4294901760
    %v1837 = vsub.f32 %v1835, %v1836
    %v1838 = vand.u32 %v1837, 4294901760
    %1839 = vmatpush.msra.mxu0 %v1838
    %v1840 = vand.u32 %v1377, 4294901760
    %v1841 = vsub.f32 %v1377, %v1840
    %v1842 = vand.u32 %v1841, 4294901760
    %v1843 = vsub.f32 %v1841, %v1842
    %v1844 = vand.u32 %v1843, 4294901760
    %1845 = vmatpush.msra.mxu0 %v1844
    %v1846 = vand.u32 %v1376, 4294901760
    %v1847 = vsub.f32 %v1376, %v1846
    %v1848 = vand.u32 %v1847, 4294901760
    %v1849 = vsub.f32 %v1847, %v1848
    %v1850 = vand.u32 %v1849, 4294901760
    %1851 = vmatpush.msra.mxu0 %v1850
    %v1852 = vand.u32 %v1375, 4294901760
    %v1853 = vsub.f32 %v1375, %v1852
    %v1854 = vand.u32 %v1853, 4294901760
    %v1855 = vsub.f32 %v1853, %v1854
    %v1856 = vand.u32 %v1855, 4294901760
    %1857 = vmatpush.msra.mxu0 %v1856
    %v1858 = vand.u32 %v1374, 4294901760
    %v1859 = vsub.f32 %v1374, %v1858
    %v1860 = vand.u32 %v1859, 4294901760
    %v1861 = vsub.f32 %v1859, %v1860
    %v1862 = vand.u32 %v1861, 4294901760
    %1863 = vmatpush.msra.mxu0 %v1862
    %v1864 = vand.u32 %v1373, 4294901760
    %v1865 = vsub.f32 %v1373, %v1864
    %v1866 = vand.u32 %v1865, 4294901760
    %v1867 = vsub.f32 %v1865, %v1866
    %v1868 = vand.u32 %v1867, 4294901760
    %1869 = vmatpush.msra.mxu0 %v1868
    %v1870 = vand.u32 %v1372, 4294901760
    %v1871 = vsub.f32 %v1372, %v1870
    %v1872 = vand.u32 %v1871, 4294901760
    %v1873 = vsub.f32 %v1871, %v1872
    %v1874 = vand.u32 %v1873, 4294901760
    %1875 = vmatpush.msra.mxu0 %v1874
    %v1876 = vand.u32 %v1371, 4294901760
    %v1877 = vsub.f32 %v1371, %v1876
    %v1878 = vand.u32 %v1877, 4294901760
    %v1879 = vsub.f32 %v1877, %v1878
    %v1880 = vand.u32 %v1879, 4294901760
    %1881 = vmatpush.msra.mxu0 %v1880
    %v1882 = vand.u32 %v1370, 4294901760
    %v1883 = vsub.f32 %v1370, %v1882
    %v1884 = vand.u32 %v1883, 4294901760
    %v1885 = vsub.f32 %v1883, %v1884
    %v1886 = vand.u32 %v1885, 4294901760
    %1887 = vmatpush.msra.mxu0 %v1886
    %v1888 = vand.u32 %v1369, 4294901760
    %v1889 = vsub.f32 %v1369, %v1888
    %v1890 = vand.u32 %v1889, 4294901760
    %v1891 = vsub.f32 %v1889, %v1890
    %v1892 = vand.u32 %v1891, 4294901760
    %1893 = vmatpush.msra.mxu0 %v1892
    %v1894 = vand.u32 %v1368, 4294901760
    %v1895 = vsub.f32 %v1368, %v1894
    %v1896 = vand.u32 %v1895, 4294901760
    %v1897 = vsub.f32 %v1895, %v1896
    %v1898 = vand.u32 %v1897, 4294901760
    %1899 = vmatpush.msra.mxu0 %v1898
    %v1900 = vand.u32 %v1367, 4294901760
    %v1901 = vsub.f32 %v1367, %v1900
    %v1902 = vand.u32 %v1901, 4294901760
    %v1903 = vsub.f32 %v1901, %v1902
    %v1904 = vand.u32 %v1903, 4294901760
    %1905 = vmatpush.msra.mxu0 %v1904
    %v1906 = vand.u32 %v1366, 4294901760
    %v1907 = vsub.f32 %v1366, %v1906
    %v1908 = vand.u32 %v1907, 4294901760
    %v1909 = vsub.f32 %v1907, %v1908
    %v1910 = vand.u32 %v1909, 4294901760
    %1911 = vmatpush.msra.mxu0 %v1910
    %v1912 = vand.u32 %v1365, 4294901760
    %v1913 = vsub.f32 %v1365, %v1912
    %v1914 = vand.u32 %v1913, 4294901760
    %v1915 = vsub.f32 %v1913, %v1914
    %v1916 = vand.u32 %v1915, 4294901760
    %1917 = vmatpush.msra.mxu0 %v1916
    %v1918 = vand.u32 %v1333, 4294901760
    %1919 = vmatmul.f32.gmra.mxu0 %v1918
    %v1920 = vpop.f32.mrf.mxu0
    %v1921 = vadd.f32 %v1812, %v1920
    %v1922 = vand.u32 %v1334, 4294901760
    %1923 = vmatmul.f32.gmra.mxu0 %v1922
    %v1924 = vpop.f32.mrf.mxu0
    %v1925 = vadd.f32 %v1820, %v1924
    %1926 = vdwg.mxu0
    %v1927 = vand.u32 %v1380, 4294901760
    %v1928 = vsub.f32 %v1380, %v1927
    %1929 = vmatpush.msra.mxu0 %v1928
    %v1930 = vand.u32 %v1379, 4294901760
    %v1931 = vsub.f32 %v1379, %v1930
    %1932 = vmatpush.msra.mxu0 %v1931
    %v1933 = vand.u32 %v1378, 4294901760
    %v1934 = vsub.f32 %v1378, %v1933
    %1935 = vmatpush.msra.mxu0 %v1934
    %v1936 = vand.u32 %v1377, 4294901760
    %v1937 = vsub.f32 %v1377, %v1936
    %1938 = vmatpush.msra.mxu0 %v1937
    %v1939 = vand.u32 %v1376, 4294901760
    %v1940 = vsub.f32 %v1376, %v1939
    %1941 = vmatpush.msra.mxu0 %v1940
    %v1942 = vand.u32 %v1375, 4294901760
    %v1943 = vsub.f32 %v1375, %v1942
    %1944 = vmatpush.msra.mxu0 %v1943
    %v1945 = vand.u32 %v1374, 4294901760
    %v1946 = vsub.f32 %v1374, %v1945
    %1947 = vmatpush.msra.mxu0 %v1946
    %v1948 = vand.u32 %v1373, 4294901760
    %v1949 = vsub.f32 %v1373, %v1948
    %1950 = vmatpush.msra.mxu0 %v1949
    %v1951 = vand.u32 %v1372, 4294901760
    %v1952 = vsub.f32 %v1372, %v1951
    %1953 = vmatpush.msra.mxu0 %v1952
    %v1954 = vand.u32 %v1371, 4294901760
    %v1955 = vsub.f32 %v1371, %v1954
    %1956 = vmatpush.msra.mxu0 %v1955
    %v1957 = vand.u32 %v1370, 4294901760
    %v1958 = vsub.f32 %v1370, %v1957
    %1959 = vmatpush.msra.mxu0 %v1958
    %v1960 = vand.u32 %v1369, 4294901760
    %v1961 = vsub.f32 %v1369, %v1960
    %1962 = vmatpush.msra.mxu0 %v1961
    %v1963 = vand.u32 %v1368, 4294901760
    %v1964 = vsub.f32 %v1368, %v1963
    %1965 = vmatpush.msra.mxu0 %v1964
    %v1966 = vand.u32 %v1367, 4294901760
    %v1967 = vsub.f32 %v1367, %v1966
    %1968 = vmatpush.msra.mxu0 %v1967
    %v1969 = vand.u32 %v1366, 4294901760
    %v1970 = vsub.f32 %v1366, %v1969
    %1971 = vmatpush.msra.mxu0 %v1970
    %v1972 = vand.u32 %v1365, 4294901760
    %v1973 = vsub.f32 %v1365, %v1972
    %1974 = vmatpush.msra.mxu0 %v1973
    %v1975 = vand.u32 %v1333, 4294901760
    %v1976 = vsub.f32 %v1333, %v1975
    %1977 = vmatmul.f32.gmra.mxu0 %v1976
    %v1978 = vpop.f32.mrf.mxu0
    %v1979 = vadd.f32 %v1921, %v1978
    %v1980 = vand.u32 %v1334, 4294901760
    %v1981 = vsub.f32 %v1334, %v1980
    %1982 = vmatmul.f32.gmra.mxu0 %v1981
    %v1983 = vpop.f32.mrf.mxu0
    %v1984 = vadd.f32 %v1925, %v1983
    %1985 = vdwg.mxu0
    %v1986 = vand.u32 %v1380, 4294901760
    %1987 = vmatpush.msra.mxu0 %v1986
    %v1988 = vand.u32 %v1379, 4294901760
    %1989 = vmatpush.msra.mxu0 %v1988
    %v1990 = vand.u32 %v1378, 4294901760
    %1991 = vmatpush.msra.mxu0 %v1990
    %v1992 = vand.u32 %v1377, 4294901760
    %1993 = vmatpush.msra.mxu0 %v1992
    %v1994 = vand.u32 %v1376, 4294901760
    %1995 = vmatpush.msra.mxu0 %v1994
    %v1996 = vand.u32 %v1375, 4294901760
    %1997 = vmatpush.msra.mxu0 %v1996
    %v1998 = vand.u32 %v1374, 4294901760
    %1999 = vmatpush.msra.mxu0 %v1998
    %v2000 = vand.u32 %v1373, 4294901760
    %2001 = vmatpush.msra.mxu0 %v2000
    %v2002 = vand.u32 %v1372, 4294901760
    %2003 = vmatpush.msra.mxu0 %v2002
    %v2004 = vand.u32 %v1371, 4294901760
    %2005 = vmatpush.msra.mxu0 %v2004
    %v2006 = vand.u32 %v1370, 4294901760
    %2007 = vmatpush.msra.mxu0 %v2006
    %v2008 = vand.u32 %v1369, 4294901760
    %2009 = vmatpush.msra.mxu0 %v2008
    %v2010 = vand.u32 %v1368, 4294901760
    %2011 = vmatpush.msra.mxu0 %v2010
    %v2012 = vand.u32 %v1367, 4294901760
    %2013 = vmatpush.msra.mxu0 %v2012
    %v2014 = vand.u32 %v1366, 4294901760
    %2015 = vmatpush.msra.mxu0 %v2014
    %v2016 = vand.u32 %v1365, 4294901760
    %2017 = vmatpush.msra.mxu0 %v2016
    %v2018 = vand.u32 %v1333, 4294901760
    %v2019 = vsub.f32 %v1333, %v2018
    %v2020 = vand.u32 %v2019, 4294901760
    %2021 = vmatmul.f32.gmra.mxu0 %v2020
    %v2022 = vpop.f32.mrf.mxu0
    %v2023 = vadd.f32 %v1979, %v2022
    %v2024 = vand.u32 %v1334, 4294901760
    %v2025 = vsub.f32 %v1334, %v2024
    %v2026 = vand.u32 %v2025, 4294901760
    %2027 = vmatmul.f32.gmra.mxu0 %v2026
    %v2028 = vpop.f32.mrf.mxu0
    %v2029 = vadd.f32 %v1984, %v2028
    %2030 = vdwg.mxu0
    %v2031 = vand.u32 %v1380, 4294901760
    %v2032 = vsub.f32 %v1380, %v2031
    %v2033 = vand.u32 %v2032, 4294901760
    %2034 = vmatpush.msra.mxu0 %v2033
    %v2035 = vand.u32 %v1379, 4294901760
    %v2036 = vsub.f32 %v1379, %v2035
    %v2037 = vand.u32 %v2036, 4294901760
    %2038 = vmatpush.msra.mxu0 %v2037
    %v2039 = vand.u32 %v1378, 4294901760
    %v2040 = vsub.f32 %v1378, %v2039
    %v2041 = vand.u32 %v2040, 4294901760
    %2042 = vmatpush.msra.mxu0 %v2041
    %v2043 = vand.u32 %v1377, 4294901760
    %v2044 = vsub.f32 %v1377, %v2043
    %v2045 = vand.u32 %v2044, 4294901760
    %2046 = vmatpush.msra.mxu0 %v2045
    %v2047 = vand.u32 %v1376, 4294901760
    %v2048 = vsub.f32 %v1376, %v2047
    %v2049 = vand.u32 %v2048, 4294901760
    %2050 = vmatpush.msra.mxu0 %v2049
    %v2051 = vand.u32 %v1375, 4294901760
    %v2052 = vsub.f32 %v1375, %v2051
    %v2053 = vand.u32 %v2052, 4294901760
    %2054 = vmatpush.msra.mxu0 %v2053
    %v2055 = vand.u32 %v1374, 4294901760
    %v2056 = vsub.f32 %v1374, %v2055
    %v2057 = vand.u32 %v2056, 4294901760
    %2058 = vmatpush.msra.mxu0 %v2057
    %v2059 = vand.u32 %v1373, 4294901760
    %v2060 = vsub.f32 %v1373, %v2059
    %v2061 = vand.u32 %v2060, 4294901760
    %2062 = vmatpush.msra.mxu0 %v2061
    %v2063 = vand.u32 %v1372, 4294901760
    %v2064 = vsub.f32 %v1372, %v2063
    %v2065 = vand.u32 %v2064, 4294901760
    %2066 = vmatpush.msra.mxu0 %v2065
    %v2067 = vand.u32 %v1371, 4294901760
    %v2068 = vsub.f32 %v1371, %v2067
    %v2069 = vand.u32 %v2068, 4294901760
    %2070 = vmatpush.msra.mxu0 %v2069
    %v2071 = vand.u32 %v1370, 4294901760
    %v2072 = vsub.f32 %v1370, %v2071
    %v2073 = vand.u32 %v2072, 4294901760
    %2074 = vmatpush.msra.mxu0 %v2073
    %v2075 = vand.u32 %v1369, 4294901760
    %v2076 = vsub.f32 %v1369, %v2075
    %v2077 = vand.u32 %v2076, 4294901760
    %2078 = vmatpush.msra.mxu0 %v2077
    %v2079 = vand.u32 %v1368, 4294901760
    %v2080 = vsub.f32 %v1368, %v2079
    %v2081 = vand.u32 %v2080, 4294901760
    %2082 = vmatpush.msra.mxu0 %v2081
    %v2083 = vand.u32 %v1367, 4294901760
    %v2084 = vsub.f32 %v1367, %v2083
    %v2085 = vand.u32 %v2084, 4294901760
    %2086 = vmatpush.msra.mxu0 %v2085
    %v2087 = vand.u32 %v1366, 4294901760
    %v2088 = vsub.f32 %v1366, %v2087
    %v2089 = vand.u32 %v2088, 4294901760
    %2090 = vmatpush.msra.mxu0 %v2089
    %v2091 = vand.u32 %v1365, 4294901760
    %v2092 = vsub.f32 %v1365, %v2091
    %v2093 = vand.u32 %v2092, 4294901760
    %2094 = vmatpush.msra.mxu0 %v2093
    %v2095 = vand.u32 %v1333, 4294901760
    %2096 = vmatmul.f32.gmra.mxu0 %v2095
    %v2097 = vpop.f32.mrf.mxu0
    %v2098 = vadd.f32 %v2023, %v2097
    %v2099 = vand.u32 %v1334, 4294901760
    %2100 = vmatmul.f32.gmra.mxu0 %v2099
    %v2101 = vpop.f32.mrf.mxu0
    %v2102 = vadd.f32 %v2029, %v2101
    %2103 = vdwg.mxu0
    %v2104 = vand.u32 %v1380, 4294901760
    %2105 = vmatpush.msra.mxu0 %v2104
    %v2106 = vand.u32 %v1379, 4294901760
    %2107 = vmatpush.msra.mxu0 %v2106
    %v2108 = vand.u32 %v1378, 4294901760
    %2109 = vmatpush.msra.mxu0 %v2108
    %v2110 = vand.u32 %v1377, 4294901760
    %2111 = vmatpush.msra.mxu0 %v2110
    %v2112 = vand.u32 %v1376, 4294901760
    %2113 = vmatpush.msra.mxu0 %v2112
    %v2114 = vand.u32 %v1375, 4294901760
    %2115 = vmatpush.msra.mxu0 %v2114
    %v2116 = vand.u32 %v1374, 4294901760
    %2117 = vmatpush.msra.mxu0 %v2116
    %v2118 = vand.u32 %v1373, 4294901760
    %2119 = vmatpush.msra.mxu0 %v2118
    %v2120 = vand.u32 %v1372, 4294901760
    %2121 = vmatpush.msra.mxu0 %v2120
    %v2122 = vand.u32 %v1371, 4294901760
    %2123 = vmatpush.msra.mxu0 %v2122
    %v2124 = vand.u32 %v1370, 4294901760
    %2125 = vmatpush.msra.mxu0 %v2124
    %v2126 = vand.u32 %v1369, 4294901760
    %2127 = vmatpush.msra.mxu0 %v2126
    %v2128 = vand.u32 %v1368, 4294901760
    %2129 = vmatpush.msra.mxu0 %v2128
    %v2130 = vand.u32 %v1367, 4294901760
    %2131 = vmatpush.msra.mxu0 %v2130
    %v2132 = vand.u32 %v1366, 4294901760
    %2133 = vmatpush.msra.mxu0 %v2132
    %v2134 = vand.u32 %v1365, 4294901760
    %2135 = vmatpush.msra.mxu0 %v2134
    %v2136 = vand.u32 %v1333, 4294901760
    %2137 = vmatmul.f32.gmra.mxu0 %v2136
    %v2138 = vpop.f32.mrf.mxu0
    %v2139 = vadd.f32 %v2098, %v2138
    %v2140 = vand.u32 %v1334, 4294901760
    %2141 = vmatmul.f32.gmra.mxu0 %v2140
    %v2142 = vpop.f32.mrf.mxu0
    %v2143 = vadd.f32 %v2102, %v2142
    %2144 = vdwg.mxu0
    %v2145 = vand.u32 %v1396, 4294901760
    %2146 = vmatpush.msra.mxu0 %v2145
    %v2147 = vand.u32 %v1395, 4294901760
    %2148 = vmatpush.msra.mxu0 %v2147
    %v2149 = vand.u32 %v1394, 4294901760
    %2150 = vmatpush.msra.mxu0 %v2149
    %v2151 = vand.u32 %v1393, 4294901760
    %2152 = vmatpush.msra.mxu0 %v2151
    %v2153 = vand.u32 %v1392, 4294901760
    %2154 = vmatpush.msra.mxu0 %v2153
    %v2155 = vand.u32 %v1391, 4294901760
    %2156 = vmatpush.msra.mxu0 %v2155
    %v2157 = vand.u32 %v1390, 4294901760
    %2158 = vmatpush.msra.mxu0 %v2157
    %v2159 = vand.u32 %v1389, 4294901760
    %2160 = vmatpush.msra.mxu0 %v2159
    %v2161 = vand.u32 %v1388, 4294901760
    %2162 = vmatpush.msra.mxu0 %v2161
    %v2163 = vand.u32 %v1387, 4294901760
    %2164 = vmatpush.msra.mxu0 %v2163
    %v2165 = vand.u32 %v1386, 4294901760
    %2166 = vmatpush.msra.mxu0 %v2165
    %v2167 = vand.u32 %v1385, 4294901760
    %2168 = vmatpush.msra.mxu0 %v2167
    %v2169 = vand.u32 %v1384, 4294901760
    %2170 = vmatpush.msra.mxu0 %v2169
    %v2171 = vand.u32 %v1383, 4294901760
    %2172 = vmatpush.msra.mxu0 %v2171
    %v2173 = vand.u32 %v1382, 4294901760
    %2174 = vmatpush.msra.mxu0 %v2173
    %v2175 = vand.u32 %v1381, 4294901760
    %2176 = vmatpush.msra.mxu0 %v2175
    %v2177 = vand.u32 %v1347, 4294901760
    %v2178 = vsub.f32 %v1347, %v2177
    %v2179 = vand.u32 %v2178, 4294901760
    %v2180 = vsub.f32 %v2178, %v2179
    %v2181 = vand.u32 %v2180, 4294901760
    %2182 = vmatmul.f32.gmra.mxu0 %v2181
    %v2183 = vpop.f32.mrf.mxu0
    %v2184 = vadd.f32 %v2139, %v2183
    %v2185 = vand.u32 %v1348, 4294901760
    %v2186 = vsub.f32 %v1348, %v2185
    %v2187 = vand.u32 %v2186, 4294901760
    %v2188 = vsub.f32 %v2186, %v2187
    %v2189 = vand.u32 %v2188, 4294901760
    %2190 = vmatmul.f32.gmra.mxu0 %v2189
    %v2191 = vpop.f32.mrf.mxu0
    %v2192 = vadd.f32 %v2143, %v2191
    %2193 = vdwg.mxu0
    %v2194 = vand.u32 %v1396, 4294901760
    %v2195 = vsub.f32 %v1396, %v2194
    %v2196 = vand.u32 %v2195, 4294901760
    %v2197 = vsub.f32 %v2195, %v2196
    %v2198 = vand.u32 %v2197, 4294901760
    %2199 = vmatpush.msra.mxu0 %v2198
    %v2200 = vand.u32 %v1395, 4294901760
    %v2201 = vsub.f32 %v1395, %v2200
    %v2202 = vand.u32 %v2201, 4294901760
    %v2203 = vsub.f32 %v2201, %v2202
    %v2204 = vand.u32 %v2203, 4294901760
    %2205 = vmatpush.msra.mxu0 %v2204
    %v2206 = vand.u32 %v1394, 4294901760
    %v2207 = vsub.f32 %v1394, %v2206
    %v2208 = vand.u32 %v2207, 4294901760
    %v2209 = vsub.f32 %v2207, %v2208
    %v2210 = vand.u32 %v2209, 4294901760
    %2211 = vmatpush.msra.mxu0 %v2210
    %v2212 = vand.u32 %v1393, 4294901760
    %v2213 = vsub.f32 %v1393, %v2212
    %v2214 = vand.u32 %v2213, 4294901760
    %v2215 = vsub.f32 %v2213, %v2214
    %v2216 = vand.u32 %v2215, 4294901760
    %2217 = vmatpush.msra.mxu0 %v2216
    %v2218 = vand.u32 %v1392, 4294901760
    %v2219 = vsub.f32 %v1392, %v2218
    %v2220 = vand.u32 %v2219, 4294901760
    %v2221 = vsub.f32 %v2219, %v2220
    %v2222 = vand.u32 %v2221, 4294901760
    %2223 = vmatpush.msra.mxu0 %v2222
    %v2224 = vand.u32 %v1391, 4294901760
    %v2225 = vsub.f32 %v1391, %v2224
    %v2226 = vand.u32 %v2225, 4294901760
    %v2227 = vsub.f32 %v2225, %v2226
    %v2228 = vand.u32 %v2227, 4294901760
    %2229 = vmatpush.msra.mxu0 %v2228
    %v2230 = vand.u32 %v1390, 4294901760
    %v2231 = vsub.f32 %v1390, %v2230
    %v2232 = vand.u32 %v2231, 4294901760
    %v2233 = vsub.f32 %v2231, %v2232
    %v2234 = vand.u32 %v2233, 4294901760
    %2235 = vmatpush.msra.mxu0 %v2234
    %v2236 = vand.u32 %v1389, 4294901760
    %v2237 = vsub.f32 %v1389, %v2236
    %v2238 = vand.u32 %v2237, 4294901760
    %v2239 = vsub.f32 %v2237, %v2238
    %v2240 = vand.u32 %v2239, 4294901760
    %2241 = vmatpush.msra.mxu0 %v2240
    %v2242 = vand.u32 %v1388, 4294901760
    %v2243 = vsub.f32 %v1388, %v2242
    %v2244 = vand.u32 %v2243, 4294901760
    %v2245 = vsub.f32 %v2243, %v2244
    %v2246 = vand.u32 %v2245, 4294901760
    %2247 = vmatpush.msra.mxu0 %v2246
    %v2248 = vand.u32 %v1387, 4294901760
    %v2249 = vsub.f32 %v1387, %v2248
    %v2250 = vand.u32 %v2249, 4294901760
    %v2251 = vsub.f32 %v2249, %v2250
    %v2252 = vand.u32 %v2251, 4294901760
    %2253 = vmatpush.msra.mxu0 %v2252
    %v2254 = vand.u32 %v1386, 4294901760
    %v2255 = vsub.f32 %v1386, %v2254
    %v2256 = vand.u32 %v2255, 4294901760
    %v2257 = vsub.f32 %v2255, %v2256
    %v2258 = vand.u32 %v2257, 4294901760
    %2259 = vmatpush.msra.mxu0 %v2258
    %v2260 = vand.u32 %v1385, 4294901760
    %v2261 = vsub.f32 %v1385, %v2260
    %v2262 = vand.u32 %v2261, 4294901760
    %v2263 = vsub.f32 %v2261, %v2262
    %v2264 = vand.u32 %v2263, 4294901760
    %2265 = vmatpush.msra.mxu0 %v2264
    %v2266 = vand.u32 %v1384, 4294901760
    %v2267 = vsub.f32 %v1384, %v2266
    %v2268 = vand.u32 %v2267, 4294901760
    %v2269 = vsub.f32 %v2267, %v2268
    %v2270 = vand.u32 %v2269, 4294901760
    %2271 = vmatpush.msra.mxu0 %v2270
    %v2272 = vand.u32 %v1383, 4294901760
    %v2273 = vsub.f32 %v1383, %v2272
    %v2274 = vand.u32 %v2273, 4294901760
    %v2275 = vsub.f32 %v2273, %v2274
    %v2276 = vand.u32 %v2275, 4294901760
    %2277 = vmatpush.msra.mxu0 %v2276
    %v2278 = vand.u32 %v1382, 4294901760
    %v2279 = vsub.f32 %v1382, %v2278
    %v2280 = vand.u32 %v2279, 4294901760
    %v2281 = vsub.f32 %v2279, %v2280
    %v2282 = vand.u32 %v2281, 4294901760
    %2283 = vmatpush.msra.mxu0 %v2282
    %v2284 = vand.u32 %v1381, 4294901760
    %v2285 = vsub.f32 %v1381, %v2284
    %v2286 = vand.u32 %v2285, 4294901760
    %v2287 = vsub.f32 %v2285, %v2286
    %v2288 = vand.u32 %v2287, 4294901760
    %2289 = vmatpush.msra.mxu0 %v2288
    %v2290 = vand.u32 %v1347, 4294901760
    %2291 = vmatmul.f32.gmra.mxu0 %v2290
    %v2292 = vpop.f32.mrf.mxu0
    %v2293 = vadd.f32 %v2184, %v2292
    %v2294 = vand.u32 %v1348, 4294901760
    %2295 = vmatmul.f32.gmra.mxu0 %v2294
    %v2296 = vpop.f32.mrf.mxu0
    %v2297 = vadd.f32 %v2192, %v2296
    %2298 = vdwg.mxu0
    %v2299 = vand.u32 %v1396, 4294901760
    %v2300 = vsub.f32 %v1396, %v2299
    %2301 = vmatpush.msra.mxu0 %v2300
    %v2302 = vand.u32 %v1395, 4294901760
    %v2303 = vsub.f32 %v1395, %v2302
    %2304 = vmatpush.msra.mxu0 %v2303
    %v2305 = vand.u32 %v1394, 4294901760
    %v2306 = vsub.f32 %v1394, %v2305
    %2307 = vmatpush.msra.mxu0 %v2306
    %v2308 = vand.u32 %v1393, 4294901760
    %v2309 = vsub.f32 %v1393, %v2308
    %2310 = vmatpush.msra.mxu0 %v2309
    %v2311 = vand.u32 %v1392, 4294901760
    %v2312 = vsub.f32 %v1392, %v2311
    %2313 = vmatpush.msra.mxu0 %v2312
    %v2314 = vand.u32 %v1391, 4294901760
    %v2315 = vsub.f32 %v1391, %v2314
    %2316 = vmatpush.msra.mxu0 %v2315
    %v2317 = vand.u32 %v1390, 4294901760
    %v2318 = vsub.f32 %v1390, %v2317
    %2319 = vmatpush.msra.mxu0 %v2318
    %v2320 = vand.u32 %v1389, 4294901760
    %v2321 = vsub.f32 %v1389, %v2320
    %2322 = vmatpush.msra.mxu0 %v2321
    %v2323 = vand.u32 %v1388, 4294901760
    %v2324 = vsub.f32 %v1388, %v2323
    %2325 = vmatpush.msra.mxu0 %v2324
    %v2326 = vand.u32 %v1387, 4294901760
    %v2327 = vsub.f32 %v1387, %v2326
    %2328 = vmatpush.msra.mxu0 %v2327
    %v2329 = vand.u32 %v1386, 4294901760
    %v2330 = vsub.f32 %v1386, %v2329
    %2331 = vmatpush.msra.mxu0 %v2330
    %v2332 = vand.u32 %v1385, 4294901760
    %v2333 = vsub.f32 %v1385, %v2332
    %2334 = vmatpush.msra.mxu0 %v2333
    %v2335 = vand.u32 %v1384, 4294901760
    %v2336 = vsub.f32 %v1384, %v2335
    %2337 = vmatpush.msra.mxu0 %v2336
    %v2338 = vand.u32 %v1383, 4294901760
    %v2339 = vsub.f32 %v1383, %v2338
    %2340 = vmatpush.msra.mxu0 %v2339
    %v2341 = vand.u32 %v1382, 4294901760
    %v2342 = vsub.f32 %v1382, %v2341
    %2343 = vmatpush.msra.mxu0 %v2342
    %v2344 = vand.u32 %v1381, 4294901760
    %v2345 = vsub.f32 %v1381, %v2344
    %2346 = vmatpush.msra.mxu0 %v2345
    %v2347 = vand.u32 %v1347, 4294901760
    %v2348 = vsub.f32 %v1347, %v2347
    %2349 = vmatmul.f32.gmra.mxu0 %v2348
    %v2350 = vpop.f32.mrf.mxu0
    %v2351 = vadd.f32 %v2293, %v2350
    %v2352 = vand.u32 %v1348, 4294901760
    %v2353 = vsub.f32 %v1348, %v2352
    %2354 = vmatmul.f32.gmra.mxu0 %v2353
    %v2355 = vpop.f32.mrf.mxu0
    %v2356 = vadd.f32 %v2297, %v2355
    %2357 = vdwg.mxu0
    %v2358 = vand.u32 %v1396, 4294901760
    %2359 = vmatpush.msra.mxu0 %v2358
    %v2360 = vand.u32 %v1395, 4294901760
    %2361 = vmatpush.msra.mxu0 %v2360
    %v2362 = vand.u32 %v1394, 4294901760
    %2363 = vmatpush.msra.mxu0 %v2362
    %v2364 = vand.u32 %v1393, 4294901760
    %2365 = vmatpush.msra.mxu0 %v2364
    %v2366 = vand.u32 %v1392, 4294901760
    %2367 = vmatpush.msra.mxu0 %v2366
    %v2368 = vand.u32 %v1391, 4294901760
    %2369 = vmatpush.msra.mxu0 %v2368
    %v2370 = vand.u32 %v1390, 4294901760
    %2371 = vmatpush.msra.mxu0 %v2370
    %v2372 = vand.u32 %v1389, 4294901760
    %2373 = vmatpush.msra.mxu0 %v2372
    %v2374 = vand.u32 %v1388, 4294901760
    %2375 = vmatpush.msra.mxu0 %v2374
    %v2376 = vand.u32 %v1387, 4294901760
    %2377 = vmatpush.msra.mxu0 %v2376
    %v2378 = vand.u32 %v1386, 4294901760
    %2379 = vmatpush.msra.mxu0 %v2378
    %v2380 = vand.u32 %v1385, 4294901760
    %2381 = vmatpush.msra.mxu0 %v2380
    %v2382 = vand.u32 %v1384, 4294901760
    %2383 = vmatpush.msra.mxu0 %v2382
    %v2384 = vand.u32 %v1383, 4294901760
    %2385 = vmatpush.msra.mxu0 %v2384
    %v2386 = vand.u32 %v1382, 4294901760
    %2387 = vmatpush.msra.mxu0 %v2386
    %v2388 = vand.u32 %v1381, 4294901760
    %2389 = vmatpush.msra.mxu0 %v2388
    %v2390 = vand.u32 %v1347, 4294901760
    %v2391 = vsub.f32 %v1347, %v2390
    %v2392 = vand.u32 %v2391, 4294901760
    %2393 = vmatmul.f32.gmra.mxu0 %v2392
    %v2394 = vpop.f32.mrf.mxu0
    %v2395 = vadd.f32 %v2351, %v2394
    %v2396 = vand.u32 %v1348, 4294901760
    %v2397 = vsub.f32 %v1348, %v2396
    %v2398 = vand.u32 %v2397, 4294901760
    %2399 = vmatmul.f32.gmra.mxu0 %v2398
    %v2400 = vpop.f32.mrf.mxu0
    %v2401 = vadd.f32 %v2356, %v2400
    %2402 = vdwg.mxu0
    %v2403 = vand.u32 %v1396, 4294901760
    %v2404 = vsub.f32 %v1396, %v2403
    %v2405 = vand.u32 %v2404, 4294901760
    %2406 = vmatpush.msra.mxu0 %v2405
    %v2407 = vand.u32 %v1395, 4294901760
    %v2408 = vsub.f32 %v1395, %v2407
    %v2409 = vand.u32 %v2408, 4294901760
    %2410 = vmatpush.msra.mxu0 %v2409
    %v2411 = vand.u32 %v1394, 4294901760
    %v2412 = vsub.f32 %v1394, %v2411
    %v2413 = vand.u32 %v2412, 4294901760
    %2414 = vmatpush.msra.mxu0 %v2413
    %v2415 = vand.u32 %v1393, 4294901760
    %v2416 = vsub.f32 %v1393, %v2415
    %v2417 = vand.u32 %v2416, 4294901760
    %2418 = vmatpush.msra.mxu0 %v2417
    %v2419 = vand.u32 %v1392, 4294901760
    %v2420 = vsub.f32 %v1392, %v2419
    %v2421 = vand.u32 %v2420, 4294901760
    %2422 = vmatpush.msra.mxu0 %v2421
    %v2423 = vand.u32 %v1391, 4294901760
    %v2424 = vsub.f32 %v1391, %v2423
    %v2425 = vand.u32 %v2424, 4294901760
    %2426 = vmatpush.msra.mxu0 %v2425
    %v2427 = vand.u32 %v1390, 4294901760
    %v2428 = vsub.f32 %v1390, %v2427
    %v2429 = vand.u32 %v2428, 4294901760
    %2430 = vmatpush.msra.mxu0 %v2429
    %v2431 = vand.u32 %v1389, 4294901760
    %v2432 = vsub.f32 %v1389, %v2431
    %v2433 = vand.u32 %v2432, 4294901760
    %2434 = vmatpush.msra.mxu0 %v2433
    %v2435 = vand.u32 %v1388, 4294901760
    %v2436 = vsub.f32 %v1388, %v2435
    %v2437 = vand.u32 %v2436, 4294901760
    %2438 = vmatpush.msra.mxu0 %v2437
    %v2439 = vand.u32 %v1387, 4294901760
    %v2440 = vsub.f32 %v1387, %v2439
    %v2441 = vand.u32 %v2440, 4294901760
    %2442 = vmatpush.msra.mxu0 %v2441
    %v2443 = vand.u32 %v1386, 4294901760
    %v2444 = vsub.f32 %v1386, %v2443
    %v2445 = vand.u32 %v2444, 4294901760
    %2446 = vmatpush.msra.mxu0 %v2445
    %v2447 = vand.u32 %v1385, 4294901760
    %v2448 = vsub.f32 %v1385, %v2447
    %v2449 = vand.u32 %v2448, 4294901760
    %2450 = vmatpush.msra.mxu0 %v2449
    %v2451 = vand.u32 %v1384, 4294901760
    %v2452 = vsub.f32 %v1384, %v2451
    %v2453 = vand.u32 %v2452, 4294901760
    %2454 = vmatpush.msra.mxu0 %v2453
    %v2455 = vand.u32 %v1383, 4294901760
    %v2456 = vsub.f32 %v1383, %v2455
    %v2457 = vand.u32 %v2456, 4294901760
    %2458 = vmatpush.msra.mxu0 %v2457
    %v2459 = vand.u32 %v1382, 4294901760
    %v2460 = vsub.f32 %v1382, %v2459
    %v2461 = vand.u32 %v2460, 4294901760
    %2462 = vmatpush.msra.mxu0 %v2461
    %v2463 = vand.u32 %v1381, 4294901760
    %v2464 = vsub.f32 %v1381, %v2463
    %v2465 = vand.u32 %v2464, 4294901760
    %2466 = vmatpush.msra.mxu0 %v2465
    %v2467 = vand.u32 %v1347, 4294901760
    %2468 = vmatmul.f32.gmra.mxu0 %v2467
    %v2469 = vpop.f32.mrf.mxu0
    %v2470 = vadd.f32 %v2395, %v2469
    %v2471 = vand.u32 %v1348, 4294901760
    %2472 = vmatmul.f32.gmra.mxu0 %v2471
    %v2473 = vpop.f32.mrf.mxu0
    %v2474 = vadd.f32 %v2401, %v2473
    %2475 = vdwg.mxu0
    %v2476 = vand.u32 %v1396, 4294901760
    %2477 = vmatpush.msra.mxu0 %v2476
    %v2478 = vand.u32 %v1395, 4294901760
    %2479 = vmatpush.msra.mxu0 %v2478
    %v2480 = vand.u32 %v1394, 4294901760
    %2481 = vmatpush.msra.mxu0 %v2480
    %v2482 = vand.u32 %v1393, 4294901760
    %2483 = vmatpush.msra.mxu0 %v2482
    %v2484 = vand.u32 %v1392, 4294901760
    %2485 = vmatpush.msra.mxu0 %v2484
    %v2486 = vand.u32 %v1391, 4294901760
    %2487 = vmatpush.msra.mxu0 %v2486
    %v2488 = vand.u32 %v1390, 4294901760
    %2489 = vmatpush.msra.mxu0 %v2488
    %v2490 = vand.u32 %v1389, 4294901760
    %2491 = vmatpush.msra.mxu0 %v2490
    %v2492 = vand.u32 %v1388, 4294901760
    %2493 = vmatpush.msra.mxu0 %v2492
    %v2494 = vand.u32 %v1387, 4294901760
    %2495 = vmatpush.msra.mxu0 %v2494
    %v2496 = vand.u32 %v1386, 4294901760
    %2497 = vmatpush.msra.mxu0 %v2496
    %v2498 = vand.u32 %v1385, 4294901760
    %2499 = vmatpush.msra.mxu0 %v2498
    %v2500 = vand.u32 %v1384, 4294901760
    %2501 = vmatpush.msra.mxu0 %v2500
    %v2502 = vand.u32 %v1383, 4294901760
    %2503 = vmatpush.msra.mxu0 %v2502
    %v2504 = vand.u32 %v1382, 4294901760
    %2505 = vmatpush.msra.mxu0 %v2504
    %v2506 = vand.u32 %v1381, 4294901760
    %2507 = vmatpush.msra.mxu0 %v2506
    %v2508 = vand.u32 %v1347, 4294901760
    %2509 = vmatmul.f32.gmra.mxu0 %v2508
    %v2510 = vpop.f32.mrf.mxu0
    %v2511 = vadd.f32 %v2470, %v2510
    %v2512 = vand.u32 %v1348, 4294901760
    %2513 = vmatmul.f32.gmra.mxu0 %v2512
    %v2514 = vpop.f32.mrf.mxu0
    %v2515 = vadd.f32 %v2474, %v2514
    %2516 = vdwg.mxu0
    %2517 = vadd.xlane.f32.xlu0 %v2511
    %v2518 = vpop.xlane.xlu0 %2517
    %2519 = vadd.xlane.f32.xlu0 %v2515
    %v2520 = vpop.xlane.xlu0 %2519
    %v2521 = vmul.f32 %v2518, 0.03125
    %v2522 = vmul.f32 %v2520, 0.03125
    %v2523 = vsub.f32 %v2511, %v2521
    %v2524 = vsub.f32 %v2515, %v2522
    %v2525 = vmul.f32 %v2523, %v92
    %v2526 = vmul.f32 %v2524, %v92
    %v2527 = vmul.f32 %v2525, %v2525
    %v2528 = vmul.f32 %v2526, %v2526
    %2529 = vadd.xlane.f32.xlu0 %v2527
    %v2530 = vpop.xlane.xlu0 %2529
    %2531 = vadd.xlane.f32.xlu0 %v2528
    %v2532 = vpop.xlane.xlu0 %2531
    %v2533 = vmul.f32 %v2530, 0.03125
    %v2534 = vmul.f32 %v2532, 0.03125
    %v2535 = vadd.f32 %v2533, 1e-05
    %v2536 = vadd.f32 %v2534, 1e-05
    %v2537 = vrsqrt.pop %v2535
    %v2538 = vmul.f32 %v2537, %v2535
    %v2539 = vmul.f32 %v2538, %v2537
    %v2540 = vmul.f32 0.5, %v2539
    %v2541 = vsub.f32 1.5, %v2540
    %v2542 = vmul.f32 %v2537, %v2541
    %vm2543 = vweird.f32 %v2535
    %vm2544 = vweird.f32 %v2537
    %vm2545 = vmor %vm2543, %vm2544
    %v2546 = vsel %vm2545, %v2537, %v2542
    %v2547 = vrsqrt.pop %v2536
    %v2548 = vmul.f32 %v2547, %v2536
    %v2549 = vmul.f32 %v2548, %v2547
    %v2550 = vmul.f32 0.5, %v2549
    %v2551 = vsub.f32 1.5, %v2550
    %v2552 = vmul.f32 %v2547, %v2551
    %vm2553 = vweird.f32 %v2536
    %vm2554 = vweird.f32 %v2547
    %vm2555 = vmor %vm2553, %vm2554
    %v2556 = vsel %vm2555, %v2547, %v2552
    %v2557 = vmul.f32 %v2523, %v2546
    %v2558 = vmul.f32 %v2524, %v2556
    %v2559 = vld [vmem:[%s7] sm:$0x1]
    %v2561 = vperm.slane %v2559, 0
    %v2563 = vmul.f32 %v2557, %v2561
    %v2564 = vmul.f32 %v2558, %v2561
    %v2565 = vld [vmem:[%s8] sm:$0x1]
    %v2567 = vperm.slane %v2565, 0
    %v2569 = vadd.f32 %v2563, %v2567
    %v2570 = vadd.f32 %v2564, %v2567
    %v2571 = vmax.f32 %v2569, 0.0
    %v2572 = vmax.f32 %v2570, 0.0
    %v2573 = vld [vmem:[%s9] sm:$0x1]
    %v2575 = vperm.slane %v2573, 0
    %v2577 = vmul.f32 %v2571, %v2575
    %v2578 = vmul.f32 %v2572, %v2575
    %2579 = vadd.xlane.f32.xlu0 %v2577
    %v2580 = vpop.xlane.xlu0 %2579
    %2581 = vadd.xlane.f32.xlu0 %v2578
    %v2582 = vpop.xlane.xlu0 %2581
    %v2583 = vld [vmem:[#allocation2] sm:$0x1]
    %v2585 = vperm.slane %v2583, 0
    %2586 = vset.pattern.permute.xlu0 0
    %2587 = vperm.xlu0 %2586, %v2585
    %v2588 = vpop.permute.xlu0 %2587
    %v2590 = vadd.f32 %v2580, %v2588
    %v2591 = vadd.f32 %v2582, %v2588
    %v2592 = vmax.f32 %v2590, 0.0
    %v2593 = vmax.f32 %v2591, 0.0
    %v2596 = vperm.slane %v2592, %v89
    %v2597 = vperm.slane %v2593, %v89
    %vm2598 = vcmask 1041409
    %v2599 = vsel %vm2598, %v2597, %v2596
    %vm2601 = vcmask 58368
    %2602 = vst.msk [vmem:[#allocation9] sm:$0x3] %vm2601, %v2599
    // Predicated region
    $region58: #{tpu_custom_call.1} parent=1 // pred_check
      _
    $region59: #{tpu_custom_call.1} parent=1 // pred_check_branch
      %2604 = sbr.rel (0) target = $region61
    $region60: #{tpu_custom_call.1} parent=1 // pred_region
      %2606 = vsyncadd [#allocation5], 0
      %s2608 = sshll.u32 [#allocation9], 4
      %s2609 = int_to_ptr.vmem [resolvable:$true] %s2608
      %s2610 = sshll.u32 %s11, 4
      %s2611 = int_to_ptr.hbm [resolvable:$true] %s2610
      %2613 = dma.vmem_to_hbm [thread:$0]  %s2609, 32, %s2611, [#allocation5]
    $region61: #{tpu_custom_call.1} parent=1 // pred_fallthru
      _
    // Predicated region
    $region62: #{tpu_custom_call.1} parent=1 // pred_check
      _
    $region63: #{tpu_custom_call.1} parent=1 // pred_check_branch
      %2615 = sbr.rel (0) target = $region65
    $region64: #{tpu_custom_call.1} parent=1 // pred_region
      %2617 = dma.done [#allocation5], 32
    $region65: #{tpu_custom_call.1} parent=1 // pred_fallthru
      _
    %2618 = vsyncpa [#allocation4], 1
    %2619 = vsyncpa [#allocation7], 1
    %2620 = vsyncpa [#allocation5], 1

</llo_original>
